<compile_context>
chip_gen: v7x
topology: tpu7x:2x2x1
jax: 0.10.0
libtpu: 0.0.40
codegen_flags: <defaults>
</compile_context>

<pallas_src>
import math

import jax
import jax.numpy as jnp
from jax import lax
from jax.experimental import pallas as pl
from jax.experimental.pallas import tpu as pltpu


def make_gru_kernel(num_layers, T, Tt, Bb, Hp):
    needs_mask = (T % Tt) != 0   # only emit the step-mask if T is padded

    def kernel(*refs):
        gx0_ref = refs[0]                        # (Tt, Bb, 3Hp) pipelined chunk
        whT0_ref, bhn0_ref = refs[1], refs[2]    # (Hp, 3Hp), (1, Hp)
        idx = 3
        upper = []
        for _ in range(num_layers - 1):
            upper.append(refs[idx:idx + 4])      # (wiT, bi(folded), whT, bhn)
            idx += 4
        wc_ref, bc_ref = refs[idx], refs[idx + 1]    # (1, Hp), (1, 1)
        out_ref = refs[idx + 2]                      # (Bb, 1)
        h_ref = refs[idx + 3]                        # VMEM (L, Bb, Hp) carry
        seq_ref = refs[idx + 4] if num_layers > 1 else None   # (Tt, Bb, Hp)
        gxs_ref = refs[idx + 5] if num_layers > 1 else None   # (Tt, Bb, 3Hp)

        chunk = pl.program_id(1)

        @pl.when(chunk == 0)
        def _():
            h_ref[...] = jnp.zeros_like(h_ref)   # fresh hidden state per batch block

        chunk_base = chunk * Tt

        def run_layer(layer_idx, gx_src, whT, bhn_row, write_seq):
            bhn = jnp.broadcast_to(bhn_row, (Bb, Hp))   # hoisted broadcast

            def step(t, h):
                gx_t = gx_src[t].astype(jnp.float32)    # (Bb, 3Hp)
                # only the hidden-to-hidden matmul + gate math are serial
                gh = jnp.dot(h.astype(whT.dtype), whT,
                             preferred_element_type=jnp.float32)
                r = jax.nn.sigmoid(gx_t[:, :Hp] + gh[:, :Hp])
                z = jax.nn.sigmoid(gx_t[:, Hp:2 * Hp] + gh[:, Hp:2 * Hp])
                n = jnp.tanh(gx_t[:, 2 * Hp:] + r * (gh[:, 2 * Hp:] + bhn))
                h_new = (1.0 - z) * n + z * h
                if needs_mask:
                    h_new = jnp.where(chunk_base + t < T, h_new, h)
                if write_seq:
                    seq_ref[t] = h_new.astype(seq_ref.dtype)
                return h_new

            h_last = lax.fori_loop(0, Tt, step, h_ref[layer_idx], unroll=True)
            h_ref[layer_idx] = h_last
            return h_last

        # ---- layer 0: gx precomputed in the wrapper (fused with the gather)
        h_last = run_layer(0, gx0_ref, whT0_ref[...], bhn0_ref[...],
                           write_seq=(num_layers > 1))

        # ---- layers 1..L-1: per-chunk hoisted input-to-hidden matmul
        for li, (wiT_ref, bi_ref, whT_ref, bhn_ref) in enumerate(upper):
            x_all = seq_ref[...].reshape(Tt * Bb, Hp)
            gx_all = jnp.dot(x_all, wiT_ref[...],
                             preferred_element_type=jnp.float32) + bi_ref[...]
            gxs_ref[...] = gx_all.reshape(Tt, Bb, 3 * Hp).astype(gxs_ref.dtype)
            is_last = (li == num_layers - 2)
            h_last = run_layer(li + 1, gxs_ref, whT_ref[...], bhn_ref[...],
                               write_seq=not is_last)
            # TODO(synk): nn.GRU inter-layer dropout (p=0.5) is training-only;
            # eval-mode semantics implemented here (no dropout).

        # classifier Linear(H,1): VPU multiply + lane reduce; recomputed each
        # chunk (cheap), only the final chunk's value is written back to HBM.
        out_ref[...] = (jnp.sum(h_last * wc_ref[...], axis=-1, keepdims=True)
                        + bc_ref[...])

    return kernel


def _pad_gates(a, H, Hp):
    """Pad the trailing (3H) gate axis to (3Hp), zero-filling each gate block."""
    lead = a.shape[:-1]
    a = a.reshape(*lead, 3, H)
    a = jnp.pad(a, [(0, 0)] * (len(lead) + 1) + [(0, Hp - H)])
    return a.reshape(*lead, 3 * Hp)


def gru_sentiment_forward(token_ids, embedding, layers, wc, bc, *,
                          time_chunk=16, batch_block=64,
                          act_dtype=jnp.float32):
    """token_ids: (B, T) int32; embedding: (V, E); layers: list of
    (w_ih (3H,in), w_hh (3H,H), b_ih (3H,), b_hh (3H,)); wc: (H,1); bc: (1,1)."""
    B, T = token_ids.shape
    H = wc.shape[0]
    num_layers = len(layers)
    Hp = ((H + 127) // 128) * 128            # lane-align each gate block
    f32 = jnp.float32

    # tiling: batch blocks (sublane-aligned) x time chunks
    Bb = max(8, (min(batch_block, ((B + 7) // 8) * 8) // 8) * 8)
    Bp = ((B + Bb - 1) // Bb) * Bb
    Tt = max(1, min(time_chunk, T))
    Tp = ((T + Tt - 1) // Tt) * Tt
    n_bblocks, n_chunks = Bp // Bb, Tp // Tt

    def fold_rz(b_ih, b_hh):
        # b_hh for the r/z gates is purely additive -> fold into precomputed gx
        return (b_ih + jnp.concatenate(
            [b_hh[:H], b_hh[H:2 * H], jnp.zeros((H,), f32)])).astype(f32)

    # glue: embedding gather + layer-0 input projection (fused by XLA),
    # gate-padded, time-major, batch/time padded -> (Tp, Bp, 3Hp). Zero padding
    # keeps real rows exact; padded lanes of h provably stay zero.
    w_ih0, w_hh0, b_ih0, b_hh0 = layers[0]
    x = jnp.take(embedding, token_ids, axis=0).astype(f32)                       # (B,T,E)
    gx0 = (jnp.einsum('bte,ge->btg', x, w_ih0.astype(f32))
           + fold_rz(b_ih0.astype(f32), b_hh0.astype(f32)))                      # (B,T,3H)
    gx0 = _pad_gates(gx0, H, Hp)                                                 # (B,T,3Hp)
    gx0 = jnp.transpose(gx0, (1, 0, 2))                                          # (T,B,3Hp)
    gx0 = jnp.pad(gx0, ((0, Tp - T), (0, Bp - B), (0, 0))).astype(act_dtype)     # (Tp,Bp,3Hp)

    def prep_wT(w):   # (3H, H) -> (Hp, 3Hp), transposed + zero-padded
        wT = _pad_gates(w.astype(f32).T, H, Hp)
        return jnp.pad(wT, ((0, Hp - H), (0, 0))).astype(act_dtype)

    def prep_b3(b):   # (3H,) -> (1, 3Hp)
        return _pad_gates(b.astype(f32), H, Hp).reshape(1, 3 * Hp)

    def prep_bhn(b_hh):   # n-gate hidden bias -> (1, Hp)
        return jnp.pad(b_hh[2 * H:].astype(f32), (0, Hp - H)).reshape(1, Hp)

    args = [gx0, prep_wT(w_hh0), prep_bhn(b_hh0)]
    for (w_ih, w_hh, b_ih, b_hh) in layers[1:]:
        args += [prep_wT(w_ih),
                 prep_b3(fold_rz(b_ih.astype(f32), b_hh.astype(f32))),
                 prep_wT(w_hh), prep_bhn(b_hh)]
    wc_row = jnp.pad(wc.astype(f32).T, ((0, 0), (0, Hp - H)))                    # (1, Hp)
    args += [wc_row, bc.astype(f32).reshape(1, 1)]

    in_specs = [pl.BlockSpec((Tt, Bb, 3 * Hp), lambda b, c: (c, b, 0))]
    for a in args[1:]:   # weights / biases: full-array resident blocks
        in_specs.append(pl.BlockSpec(a.shape, lambda b, c: (0, 0)))
    out_spec = pl.BlockSpec((Bb, 1), lambda b, c: (b, 0))

    scratch = [pltpu.VMEM((num_layers, Bb, Hp), f32)]            # hidden carry
    if num_layers > 1:
        scratch += [pltpu.VMEM((Tt, Bb, Hp), act_dtype),         # layer outputs (chunk)
                    pltpu.VMEM((Tt, Bb, 3 * Hp), act_dtype)]     # upper-layer gx (chunk)

    # VMEM budget sized from the actual buffers (x2 for double buffering + slack)
    asz = jnp.dtype(act_dtype).itemsize
    vmem_bytes = 2 * Tt * Bb * 3 * Hp * asz
    vmem_bytes += (2 * num_layers - 1) * Hp * 3 * Hp * asz
    vmem_bytes += (num_layers - 1) * 3 * Hp * 4 + num_layers * Hp * 4
    vmem_bytes += Hp * 4 + 4 + 2 * Bb * 4
    vmem_bytes += num_layers * Bb * Hp * 4
    if num_layers > 1:
        vmem_bytes += Tt * Bb * Hp * asz + Tt * Bb * 3 * Hp * asz
    vmem_limit = int(min(128 * 1024 * 1024,
                         max(32 * 1024 * 1024, 2 * vmem_bytes + 2 * 1024 * 1024)))

    kernel = make_gru_kernel(num_layers, T, Tt, Bb, Hp)
    out = pl.pallas_call(
        kernel,
        out_shape=jax.ShapeDtypeStruct((Bp, 1), jnp.float32),
        grid_spec=pltpu.PrefetchScalarGridSpec(
            num_scalar_prefetch=0,
            grid=(n_bblocks, n_chunks),
            in_specs=in_specs,
            out_specs=out_spec,
            scratch_shapes=scratch),
        compiler_params=pltpu.CompilerParams(
            dimension_semantics=("parallel", "arbitrary"),   # batch blocks // chunks serial
            vmem_limit_bytes=vmem_limit),
    )(*args)
    return out[:B]


def reference_forward(token_ids, embedding, layers, wc, bc):
    """Pure-JAX reference with identical GRU equations (PyTorch gate order r,z,n)."""
    x = jnp.take(embedding, token_ids, axis=0)  # (B, T, E)
    B, T, _ = x.shape
    H = layers[0][1].shape[1]
    for (w_ih, w_hh, b_ih, b_hh) in layers:
        h = jnp.zeros((B, H), jnp.float32)
        outs = []
        for t in range(T):
            x_t = x[:, t, :]
            gx = x_t @ w_ih.T + b_ih
            gh = h @ w_hh.T + b_hh
            r = jax.nn.sigmoid(gx[:, :H] + gh[:, :H])
            z = jax.nn.sigmoid(gx[:, H:2 * H] + gh[:, H:2 * H])
            n = jnp.tanh(gx[:, 2 * H:] + r * gh[:, 2 * H:])
            h = (1.0 - z) * n + z * h
            outs.append(h)
        x = jnp.stack(outs, axis=1)
    return x[:, -1, :] @ wc + bc


def init_params(key, vocab, E, H, num_layers):
    key, k_emb = jax.random.split(key)
    embedding = jax.random.normal(k_emb, (vocab, E), jnp.float32)
    bound = 1.0 / math.sqrt(H)
    layers = []
    for l in range(num_layers):
        in_dim = E if l == 0 else H
        key, k1, k2, k3, k4 = jax.random.split(key, 5)
        w_ih = jax.random.uniform(k1, (3 * H, in_dim), jnp.float32, -bound, bound)
        w_hh = jax.random.uniform(k2, (3 * H, H), jnp.float32, -bound, bound)
        b_ih = jax.random.uniform(k3, (3 * H,), jnp.float32, -bound, bound)
        b_hh = jax.random.uniform(k4, (3 * H,), jnp.float32, -bound, bound)
        layers.append((w_ih, w_hh, b_ih, b_hh))
    key, k5, k6 = jax.random.split(key, 3)
    lin_bound = 1.0 / math.sqrt(H)
    w_lin = jax.random.uniform(k5, (1, H), jnp.float32, -lin_bound, lin_bound)
    b_lin = jax.random.uniform(k6, (1,), jnp.float32, -lin_bound, lin_bound)
    wc = w_lin.T                 # (H, 1)
    bc = b_lin.reshape(1, 1)     # (1, 1)
    return embedding, layers, wc, bc


if __name__ == "__main__":
    B, T = 2, 8                      # batch, sequence length
    VOCAB, E, H, L = 50, 16, 32, 2   # vocab, embedding_dim, hidden_dim, num_layers

    key = jax.random.PRNGKey(0)
    key, k_ids = jax.random.split(key)
    token_ids = jax.random.randint(k_ids, (B, T), 0, VOCAB, dtype=jnp.int32)

    embedding, layers, wc, bc = init_params(key, VOCAB, E, H, L)

    # time_chunk=4 -> 2 streamed chunks: exercises the cross-chunk hidden-state carry.
    out = gru_sentiment_forward(token_ids, embedding, layers, wc, bc, time_chunk=4)
    out = jax.block_until_ready(out)

    ref = reference_forward(token_ids, embedding, layers, wc, bc)
    assert out.shape == (B, 1), out.shape
    assert jnp.allclose(out, ref, atol=1e-4, rtol=1e-4), (out, ref)
    print("KERNEL_OK")
</pallas_src>

<mosaic_0001>
module attributes {stable_mosaic.version = 11 : i64} {
  func.func @kernel(%arg0: i32, %arg1: i32, %arg2: memref<4x8x384xf32, #tpu.memory_space<vmem>>, %arg3: memref<128x384xf32, #tpu.memory_space<vmem>>, %arg4: memref<1x128xf32, #tpu.memory_space<vmem>>, %arg5: memref<128x384xf32, #tpu.memory_space<vmem>>, %arg6: memref<1x384xf32, #tpu.memory_space<vmem>>, %arg7: memref<128x384xf32, #tpu.memory_space<vmem>>, %arg8: memref<1x128xf32, #tpu.memory_space<vmem>>, %arg9: memref<1x128xf32, #tpu.memory_space<vmem>>, %arg10: memref<1x1xf32, #tpu.memory_space<vmem>>, %arg11: memref<8x1xf32, #tpu.memory_space<vmem>>, %arg12: memref<2x8x128xf32, #tpu.memory_space<vmem>>, %arg13: memref<4x8x128xf32, #tpu.memory_space<vmem>>, %arg14: memref<4x8x384xf32, #tpu.memory_space<vmem>>) attributes {dimension_semantics = [#tpu.dimension_semantics<parallel>, #tpu.dimension_semantics<arbitrary>], iteration_bounds = array<i64: 1, 2>, scalar_prefetch = 0 : i64, scratch_operands = 3 : i64, tpu.core_type = #tpu.core_type<tc>, window_params = [{transform_indices = @transform_0, window_bounds = array<i64: 4, 8, 384>}, {pipeline_mode = #tpu.pipeline_mode<synchronous>, transform_indices = @transform_1, window_bounds = array<i64: 128, 384>}, {pipeline_mode = #tpu.pipeline_mode<synchronous>, transform_indices = @transform_2, window_bounds = array<i64: 1, 128>}, {pipeline_mode = #tpu.pipeline_mode<synchronous>, transform_indices = @transform_3, window_bounds = array<i64: 128, 384>}, {pipeline_mode = #tpu.pipeline_mode<synchronous>, transform_indices = @transform_4, window_bounds = array<i64: 1, 384>}, {pipeline_mode = #tpu.pipeline_mode<synchronous>, transform_indices = @transform_5, window_bounds = array<i64: 128, 384>}, {pipeline_mode = #tpu.pipeline_mode<synchronous>, transform_indices = @transform_6, window_bounds = array<i64: 1, 128>}, {pipeline_mode = #tpu.pipeline_mode<synchronous>, transform_indices = @transform_7, window_bounds = array<i64: 1, 128>}, {pipeline_mode = #tpu.pipeline_mode<synchronous>, transform_indices = @transform_8, window_bounds = array<i64: 1, 1>}, {transform_indices = @transform_9, window_bounds = array<i64: 8, 1>}]} {
    %c0_i32 = arith.constant 0 : i32
    %0 = arith.cmpi eq, %arg1, %c0_i32 : i32
    %1 = arith.extui %0 : i1 to i32
    %c0_i32_0 = arith.constant 0 : i32
    %2 = arith.cmpi ne, %1, %c0_i32_0 : i32
    scf.if %2 {
      %cst_98 = arith.constant 0.000000e+00 : f32
      %303 = vector.broadcast %cst_98 : f32 to vector<2x8x128xf32>
      %c0_99 = arith.constant 0 : index
      %c0_100 = arith.constant 0 : index
      %c0_101 = arith.constant 0 : index
      %304 = vector.load %arg12[%c0_99, %c0_100, %c0_101] : memref<2x8x128xf32, #tpu.memory_space<vmem>>, vector<2x8x128xf32>
      tpu.vector_store %arg12[%c0_99, %c0_100, %c0_101], %303 {strides = array<i32>} : memref<2x8x128xf32, #tpu.memory_space<vmem>>, vector<2x8x128xf32>,
    } else {
    }
    %c0 = arith.constant 0 : index
    %c0_1 = arith.constant 0 : index
    %3 = vector.load %arg3[%c0, %c0_1] : memref<128x384xf32, #tpu.memory_space<vmem>>, vector<128x384xf32>
    %c0_2 = arith.constant 0 : index
    %c0_3 = arith.constant 0 : index
    %4 = vector.load %arg4[%c0_2, %c0_3] : memref<1x128xf32, #tpu.memory_space<vmem>>, vector<1x128xf32>
    %5 = vector.shape_cast %4 : vector<1x128xf32> to vector<1x128xf32>
    %6 = vector.broadcast %5 : vector<1x128xf32> to vector<8x128xf32>
    %c0_4 = arith.constant 0 : index
    %c0_5 = arith.constant 0 : index
    %c0_6 = arith.constant 0 : index
    %7 = vector.load %arg12[%c0_4, %c0_5, %c0_6] : memref<2x8x128xf32, #tpu.memory_space<vmem>>, vector<1x8x128xf32>
    %8 = vector.shape_cast %7 : vector<1x8x128xf32> to vector<8x128xf32>
    %c0_i32_7 = arith.constant 0 : i32
    %9 = arith.index_cast %c0_i32_7 : i32 to index
    %c0_8 = arith.constant 0 : index
    %c0_9 = arith.constant 0 : index
    %10 = vector.load %arg2[%9, %c0_8, %c0_9] : memref<4x8x384xf32, #tpu.memory_space<vmem>>, vector<1x8x384xf32>
    %11 = vector.shape_cast %10 : vector<1x8x384xf32> to vector<8x384xf32>
    %cst = arith.constant dense<0.000000e+00> : vector<8x384xf32>
    %12 = tpu.matmul %8, %3, %cst {dimension_numbers = #tpu.dot_dimension_numbers<[1], [0], [0], [1], [0, 0, 1, 1], [], []>} : vector<8x128xf32>, vector<128x384xf32>, vector<8x384xf32> -> vector<8x384xf32>
    %13 = vector.extract_strided_slice %11 {offsets = [0, 0], sizes = [8, 128], strides = [1, 1]} : vector<8x384xf32> to vector<8x128xf32>
    %14 = vector.extract_strided_slice %12 {offsets = [0, 0], sizes = [8, 128], strides = [1, 1]} : vector<8x384xf32> to vector<8x128xf32>
    %15 = arith.addf %13, %14 : vector<8x128xf32>
    %16 = arith.negf %15 : vector<8x128xf32>
    %17 = math.exp %16 : vector<8x128xf32>
    %cst_10 = arith.constant 1.000000e+00 : f32
    %18 = vector.broadcast %cst_10 : f32 to vector<8x128xf32>
    %19 = arith.addf %18, %17 : vector<8x128xf32>
    %20 = arith.divf %18, %19 : vector<8x128xf32>
    %21 = vector.extract_strided_slice %11 {offsets = [0, 128], sizes = [8, 128], strides = [1, 1]} : vector<8x384xf32> to vector<8x128xf32>
    %22 = vector.extract_strided_slice %12 {offsets = [0, 128], sizes = [8, 128], strides = [1, 1]} : vector<8x384xf32> to vector<8x128xf32>
    %23 = arith.addf %21, %22 : vector<8x128xf32>
    %24 = arith.negf %23 : vector<8x128xf32>
    %25 = math.exp %24 : vector<8x128xf32>
    %cst_11 = arith.constant 1.000000e+00 : f32
    %26 = vector.broadcast %cst_11 : f32 to vector<8x128xf32>
    %27 = arith.addf %26, %25 : vector<8x128xf32>
    %28 = arith.divf %26, %27 : vector<8x128xf32>
    %29 = vector.extract_strided_slice %11 {offsets = [0, 256], sizes = [8, 128], strides = [1, 1]} : vector<8x384xf32> to vector<8x128xf32>
    %30 = vector.extract_strided_slice %12 {offsets = [0, 256], sizes = [8, 128], strides = [1, 1]} : vector<8x384xf32> to vector<8x128xf32>
    %31 = arith.addf %30, %6 : vector<8x128xf32>
    %32 = arith.mulf %20, %31 : vector<8x128xf32>
    %33 = arith.addf %29, %32 : vector<8x128xf32>
    %34 = math.tanh %33 : vector<8x128xf32>
    %cst_12 = arith.constant 1.000000e+00 : f32
    %35 = vector.broadcast %cst_12 : f32 to vector<8x128xf32>
    %36 = arith.subf %35, %28 : vector<8x128xf32>
    %37 = arith.mulf %36, %34 : vector<8x128xf32>
    %38 = arith.mulf %28, %8 : vector<8x128xf32>
    %39 = arith.addf %37, %38 : vector<8x128xf32>
    %40 = arith.index_cast %c0_i32_7 : i32 to index
    %c0_13 = arith.constant 0 : index
    %c0_14 = arith.constant 0 : index
    %41 = vector.load %arg13[%40, %c0_13, %c0_14] : memref<4x8x128xf32, #tpu.memory_space<vmem>>, vector<1x8x128xf32>
    %42 = vector.shape_cast %41 : vector<1x8x128xf32> to vector<8x128xf32>
    %43 = vector.shape_cast %39 : vector<8x128xf32> to vector<1x8x128xf32>
    tpu.vector_store %arg13[%40, %c0_13, %c0_14], %43 {strides = array<i32>} : memref<4x8x128xf32, #tpu.memory_space<vmem>>, vector<1x8x128xf32>,
    %c1_i32 = arith.constant 1 : i32
    %44 = arith.index_cast %c1_i32 : i32 to index
    %c0_15 = arith.constant 0 : index
    %c0_16 = arith.constant 0 : index
    %45 = vector.load %arg2[%44, %c0_15, %c0_16] : memref<4x8x384xf32, #tpu.memory_space<vmem>>, vector<1x8x384xf32>
    %46 = vector.shape_cast %45 : vector<1x8x384xf32> to vector<8x384xf32>
    %cst_17 = arith.constant dense<0.000000e+00> : vector<8x384xf32>
    %47 = tpu.matmul %39, %3, %cst_17 {dimension_numbers = #tpu.dot_dimension_numbers<[1], [0], [0], [1], [0, 0, 1, 1], [], []>} : vector<8x128xf32>, vector<128x384xf32>, vector<8x384xf32> -> vector<8x384xf32>
    %48 = vector.extract_strided_slice %46 {offsets = [0, 0], sizes = [8, 128], strides = [1, 1]} : vector<8x384xf32> to vector<8x128xf32>
    %49 = vector.extract_strided_slice %47 {offsets = [0, 0], sizes = [8, 128], strides = [1, 1]} : vector<8x384xf32> to vector<8x128xf32>
    %50 = arith.addf %48, %49 : vector<8x128xf32>
    %51 = arith.negf %50 : vector<8x128xf32>
    %52 = math.exp %51 : vector<8x128xf32>
    %cst_18 = arith.constant 1.000000e+00 : f32
    %53 = vector.broadcast %cst_18 : f32 to vector<8x128xf32>
    %54 = arith.addf %53, %52 : vector<8x128xf32>
    %55 = arith.divf %53, %54 : vector<8x128xf32>
    %56 = vector.extract_strided_slice %46 {offsets = [0, 128], sizes = [8, 128], strides = [1, 1]} : vector<8x384xf32> to vector<8x128xf32>
    %57 = vector.extract_strided_slice %47 {offsets = [0, 128], sizes = [8, 128], strides = [1, 1]} : vector<8x384xf32> to vector<8x128xf32>
    %58 = arith.addf %56, %57 : vector<8x128xf32>
    %59 = arith.negf %58 : vector<8x128xf32>
    %60 = math.exp %59 : vector<8x128xf32>
    %cst_19 = arith.constant 1.000000e+00 : f32
    %61 = vector.broadcast %cst_19 : f32 to vector<8x128xf32>
    %62 = arith.addf %61, %60 : vector<8x128xf32>
    %63 = arith.divf %61, %62 : vector<8x128xf32>
    %64 = vector.extract_strided_slice %46 {offsets = [0, 256], sizes = [8, 128], strides = [1, 1]} : vector<8x384xf32> to vector<8x128xf32>
    %65 = vector.extract_strided_slice %47 {offsets = [0, 256], sizes = [8, 128], strides = [1, 1]} : vector<8x384xf32> to vector<8x128xf32>
    %66 = arith.addf %65, %6 : vector<8x128xf32>
    %67 = arith.mulf %55, %66 : vector<8x128xf32>
    %68 = arith.addf %64, %67 : vector<8x128xf32>
    %69 = math.tanh %68 : vector<8x128xf32>
    %cst_20 = arith.constant 1.000000e+00 : f32
    %70 = vector.broadcast %cst_20 : f32 to vector<8x128xf32>
    %71 = arith.subf %70, %63 : vector<8x128xf32>
    %72 = arith.mulf %71, %69 : vector<8x128xf32>
    %73 = arith.mulf %63, %39 : vector<8x128xf32>
    %74 = arith.addf %72, %73 : vector<8x128xf32>
    %75 = arith.index_cast %c1_i32 : i32 to index
    %c0_21 = arith.constant 0 : index
    %c0_22 = arith.constant 0 : index
    %76 = vector.load %arg13[%75, %c0_21, %c0_22] : memref<4x8x128xf32, #tpu.memory_space<vmem>>, vector<1x8x128xf32>
    %77 = vector.shape_cast %76 : vector<1x8x128xf32> to vector<8x128xf32>
    %78 = vector.shape_cast %74 : vector<8x128xf32> to vector<1x8x128xf32>
    tpu.vector_store %arg13[%75, %c0_21, %c0_22], %78 {strides = array<i32>} : memref<4x8x128xf32, #tpu.memory_space<vmem>>, vector<1x8x128xf32>,
    %c2_i32 = arith.constant 2 : i32
    %79 = arith.index_cast %c2_i32 : i32 to index
    %c0_23 = arith.constant 0 : index
    %c0_24 = arith.constant 0 : index
    %80 = vector.load %arg2[%79, %c0_23, %c0_24] : memref<4x8x384xf32, #tpu.memory_space<vmem>>, vector<1x8x384xf32>
    %81 = vector.shape_cast %80 : vector<1x8x384xf32> to vector<8x384xf32>
    %cst_25 = arith.constant dense<0.000000e+00> : vector<8x384xf32>
    %82 = tpu.matmul %74, %3, %cst_25 {dimension_numbers = #tpu.dot_dimension_numbers<[1], [0], [0], [1], [0, 0, 1, 1], [], []>} : vector<8x128xf32>, vector<128x384xf32>, vector<8x384xf32> -> vector<8x384xf32>
    %83 = vector.extract_strided_slice %81 {offsets = [0, 0], sizes = [8, 128], strides = [1, 1]} : vector<8x384xf32> to vector<8x128xf32>
    %84 = vector.extract_strided_slice %82 {offsets = [0, 0], sizes = [8, 128], strides = [1, 1]} : vector<8x384xf32> to vector<8x128xf32>
    %85 = arith.addf %83, %84 : vector<8x128xf32>
    %86 = arith.negf %85 : vector<8x128xf32>
    %87 = math.exp %86 : vector<8x128xf32>
    %cst_26 = arith.constant 1.000000e+00 : f32
    %88 = vector.broadcast %cst_26 : f32 to vector<8x128xf32>
    %89 = arith.addf %88, %87 : vector<8x128xf32>
    %90 = arith.divf %88, %89 : vector<8x128xf32>
    %91 = vector.extract_strided_slice %81 {offsets = [0, 128], sizes = [8, 128], strides = [1, 1]} : vector<8x384xf32> to vector<8x128xf32>
    %92 = vector.extract_strided_slice %82 {offsets = [0, 128], sizes = [8, 128], strides = [1, 1]} : vector<8x384xf32> to vector<8x128xf32>
    %93 = arith.addf %91, %92 : vector<8x128xf32>
    %94 = arith.negf %93 : vector<8x128xf32>
    %95 = math.exp %94 : vector<8x128xf32>
    %cst_27 = arith.constant 1.000000e+00 : f32
    %96 = vector.broadcast %cst_27 : f32 to vector<8x128xf32>
    %97 = arith.addf %96, %95 : vector<8x128xf32>
    %98 = arith.divf %96, %97 : vector<8x128xf32>
    %99 = vector.extract_strided_slice %81 {offsets = [0, 256], sizes = [8, 128], strides = [1, 1]} : vector<8x384xf32> to vector<8x128xf32>
    %100 = vector.extract_strided_slice %82 {offsets = [0, 256], sizes = [8, 128], strides = [1, 1]} : vector<8x384xf32> to vector<8x128xf32>
    %101 = arith.addf %100, %6 : vector<8x128xf32>
    %102 = arith.mulf %90, %101 : vector<8x128xf32>
    %103 = arith.addf %99, %102 : vector<8x128xf32>
    %104 = math.tanh %103 : vector<8x128xf32>
    %cst_28 = arith.constant 1.000000e+00 : f32
    %105 = vector.broadcast %cst_28 : f32 to vector<8x128xf32>
    %106 = arith.subf %105, %98 : vector<8x128xf32>
    %107 = arith.mulf %106, %104 : vector<8x128xf32>
    %108 = arith.mulf %98, %74 : vector<8x128xf32>
    %109 = arith.addf %107, %108 : vector<8x128xf32>
    %110 = arith.index_cast %c2_i32 : i32 to index
    %c0_29 = arith.constant 0 : index
    %c0_30 = arith.constant 0 : index
    %111 = vector.load %arg13[%110, %c0_29, %c0_30] : memref<4x8x128xf32, #tpu.memory_space<vmem>>, vector<1x8x128xf32>
    %112 = vector.shape_cast %111 : vector<1x8x128xf32> to vector<8x128xf32>
    %113 = vector.shape_cast %109 : vector<8x128xf32> to vector<1x8x128xf32>
    tpu.vector_store %arg13[%110, %c0_29, %c0_30], %113 {strides = array<i32>} : memref<4x8x128xf32, #tpu.memory_space<vmem>>, vector<1x8x128xf32>,
    %c3_i32 = arith.constant 3 : i32
    %114 = arith.index_cast %c3_i32 : i32 to index
    %c0_31 = arith.constant 0 : index
    %c0_32 = arith.constant 0 : index
    %115 = vector.load %arg2[%114, %c0_31, %c0_32] : memref<4x8x384xf32, #tpu.memory_space<vmem>>, vector<1x8x384xf32>
    %116 = vector.shape_cast %115 : vector<1x8x384xf32> to vector<8x384xf32>
    %cst_33 = arith.constant dense<0.000000e+00> : vector<8x384xf32>
    %117 = tpu.matmul %109, %3, %cst_33 {dimension_numbers = #tpu.dot_dimension_numbers<[1], [0], [0], [1], [0, 0, 1, 1], [], []>} : vector<8x128xf32>, vector<128x384xf32>, vector<8x384xf32> -> vector<8x384xf32>
    %118 = vector.extract_strided_slice %116 {offsets = [0, 0], sizes = [8, 128], strides = [1, 1]} : vector<8x384xf32> to vector<8x128xf32>
    %119 = vector.extract_strided_slice %117 {offsets = [0, 0], sizes = [8, 128], strides = [1, 1]} : vector<8x384xf32> to vector<8x128xf32>
    %120 = arith.addf %118, %119 : vector<8x128xf32>
    %121 = arith.negf %120 : vector<8x128xf32>
    %122 = math.exp %121 : vector<8x128xf32>
    %cst_34 = arith.constant 1.000000e+00 : f32
    %123 = vector.broadcast %cst_34 : f32 to vector<8x128xf32>
    %124 = arith.addf %123, %122 : vector<8x128xf32>
    %125 = arith.divf %123, %124 : vector<8x128xf32>
    %126 = vector.extract_strided_slice %116 {offsets = [0, 128], sizes = [8, 128], strides = [1, 1]} : vector<8x384xf32> to vector<8x128xf32>
    %127 = vector.extract_strided_slice %117 {offsets = [0, 128], sizes = [8, 128], strides = [1, 1]} : vector<8x384xf32> to vector<8x128xf32>
    %128 = arith.addf %126, %127 : vector<8x128xf32>
    %129 = arith.negf %128 : vector<8x128xf32>
    %130 = math.exp %129 : vector<8x128xf32>
    %cst_35 = arith.constant 1.000000e+00 : f32
    %131 = vector.broadcast %cst_35 : f32 to vector<8x128xf32>
    %132 = arith.addf %131, %130 : vector<8x128xf32>
    %133 = arith.divf %131, %132 : vector<8x128xf32>
    %134 = vector.extract_strided_slice %116 {offsets = [0, 256], sizes = [8, 128], strides = [1, 1]} : vector<8x384xf32> to vector<8x128xf32>
    %135 = vector.extract_strided_slice %117 {offsets = [0, 256], sizes = [8, 128], strides = [1, 1]} : vector<8x384xf32> to vector<8x128xf32>
    %136 = arith.addf %135, %6 : vector<8x128xf32>
    %137 = arith.mulf %125, %136 : vector<8x128xf32>
    %138 = arith.addf %134, %137 : vector<8x128xf32>
    %139 = math.tanh %138 : vector<8x128xf32>
    %cst_36 = arith.constant 1.000000e+00 : f32
    %140 = vector.broadcast %cst_36 : f32 to vector<8x128xf32>
    %141 = arith.subf %140, %133 : vector<8x128xf32>
    %142 = arith.mulf %141, %139 : vector<8x128xf32>
    %143 = arith.mulf %133, %109 : vector<8x128xf32>
    %144 = arith.addf %142, %143 : vector<8x128xf32>
    %145 = arith.index_cast %c3_i32 : i32 to index
    %c0_37 = arith.constant 0 : index
    %c0_38 = arith.constant 0 : index
    %146 = vector.load %arg13[%145, %c0_37, %c0_38] : memref<4x8x128xf32, #tpu.memory_space<vmem>>, vector<1x8x128xf32>
    %147 = vector.shape_cast %146 : vector<1x8x128xf32> to vector<8x128xf32>
    %148 = vector.shape_cast %144 : vector<8x128xf32> to vector<1x8x128xf32>
    tpu.vector_store %arg13[%145, %c0_37, %c0_38], %148 {strides = array<i32>} : memref<4x8x128xf32, #tpu.memory_space<vmem>>, vector<1x8x128xf32>,
    %c4_i32 = arith.constant 4 : i32
    %c0_39 = arith.constant 0 : index
    %c0_40 = arith.constant 0 : index
    %c0_41 = arith.constant 0 : index
    %149 = vector.load %arg12[%c0_39, %c0_40, %c0_41] : memref<2x8x128xf32, #tpu.memory_space<vmem>>, vector<1x8x128xf32>
    %150 = vector.shape_cast %149 : vector<1x8x128xf32> to vector<8x128xf32>
    %151 = vector.shape_cast %144 : vector<8x128xf32> to vector<1x8x128xf32>
    tpu.vector_store %arg12[%c0_39, %c0_40, %c0_41], %151 {strides = array<i32>} : memref<2x8x128xf32, #tpu.memory_space<vmem>>, vector<1x8x128xf32>,
    %c0_42 = arith.constant 0 : index
    %c0_43 = arith.constant 0 : index
    %c0_44 = arith.constant 0 : index
    %152 = vector.load %arg13[%c0_42, %c0_43, %c0_44] : memref<4x8x128xf32, #tpu.memory_space<vmem>>, vector<4x8x128xf32>
    %153 = vector.shape_cast %152 : vector<4x8x128xf32> to vector<32x128xf32>
    %c0_45 = arith.constant 0 : index
    %c0_46 = arith.constant 0 : index
    %154 = vector.load %arg5[%c0_45, %c0_46] : memref<128x384xf32, #tpu.memory_space<vmem>>, vector<128x384xf32>
    %cst_47 = arith.constant dense<0.000000e+00> : vector<32x384xf32>
    %155 = tpu.matmul %153, %154, %cst_47 {dimension_numbers = #tpu.dot_dimension_numbers<[1], [0], [0], [1], [0, 0, 1, 1], [], []>} : vector<32x128xf32>, vector<128x384xf32>, vector<32x384xf32> -> vector<32x384xf32>
    %c0_48 = arith.constant 0 : index
    %c0_49 = arith.constant 0 : index
    %156 = vector.load %arg6[%c0_48, %c0_49] : memref<1x384xf32, #tpu.memory_space<vmem>>, vector<1x384xf32>
    %157 = vector.broadcast %156 : vector<1x384xf32> to vector<32x384xf32>
    %158 = arith.addf %155, %157 : vector<32x384xf32>
    %159 = vector.shape_cast %158 : vector<32x384xf32> to vector<4x8x384xf32>
    %c0_50 = arith.constant 0 : index
    %c0_51 = arith.constant 0 : index
    %c0_52 = arith.constant 0 : index
    %160 = vector.load %arg14[%c0_50, %c0_51, %c0_52] : memref<4x8x384xf32, #tpu.memory_space<vmem>>, vector<4x8x384xf32>
    tpu.vector_store %arg14[%c0_50, %c0_51, %c0_52], %159 {strides = array<i32>} : memref<4x8x384xf32, #tpu.memory_space<vmem>>, vector<4x8x384xf32>,
    %c0_53 = arith.constant 0 : index
    %c0_54 = arith.constant 0 : index
    %161 = vector.load %arg7[%c0_53, %c0_54] : memref<128x384xf32, #tpu.memory_space<vmem>>, vector<128x384xf32>
    %c0_55 = arith.constant 0 : index
    %c0_56 = arith.constant 0 : index
    %162 = vector.load %arg8[%c0_55, %c0_56] : memref<1x128xf32, #tpu.memory_space<vmem>>, vector<1x128xf32>
    %163 = vector.shape_cast %162 : vector<1x128xf32> to vector<1x128xf32>
    %164 = vector.broadcast %163 : vector<1x128xf32> to vector<8x128xf32>
    %c1 = arith.constant 1 : index
    %c0_57 = arith.constant 0 : index
    %c0_58 = arith.constant 0 : index
    %165 = vector.load %arg12[%c1, %c0_57, %c0_58] : memref<2x8x128xf32, #tpu.memory_space<vmem>>, vector<1x8x128xf32>
    %166 = vector.shape_cast %165 : vector<1x8x128xf32> to vector<8x128xf32>
    %c0_i32_59 = arith.constant 0 : i32
    %167 = arith.index_cast %c0_i32_59 : i32 to index
    %c0_60 = arith.constant 0 : index
    %c0_61 = arith.constant 0 : index
    %168 = vector.load %arg14[%167, %c0_60, %c0_61] : memref<4x8x384xf32, #tpu.memory_space<vmem>>, vector<1x8x384xf32>
    %169 = vector.shape_cast %168 : vector<1x8x384xf32> to vector<8x384xf32>
    %cst_62 = arith.constant dense<0.000000e+00> : vector<8x384xf32>
    %170 = tpu.matmul %166, %161, %cst_62 {dimension_numbers = #tpu.dot_dimension_numbers<[1], [0], [0], [1], [0, 0, 1, 1], [], []>} : vector<8x128xf32>, vector<128x384xf32>, vector<8x384xf32> -> vector<8x384xf32>
    %171 = vector.extract_strided_slice %169 {offsets = [0, 0], sizes = [8, 128], strides = [1, 1]} : vector<8x384xf32> to vector<8x128xf32>
    %172 = vector.extract_strided_slice %170 {offsets = [0, 0], sizes = [8, 128], strides = [1, 1]} : vector<8x384xf32> to vector<8x128xf32>
    %173 = arith.addf %171, %172 : vector<8x128xf32>
    %174 = arith.negf %173 : vector<8x128xf32>
    %175 = math.exp %174 : vector<8x128xf32>
    %cst_63 = arith.constant 1.000000e+00 : f32
    %176 = vector.broadcast %cst_63 : f32 to vector<8x128xf32>
    %177 = arith.addf %176, %175 : vector<8x128xf32>
    %178 = arith.divf %176, %177 : vector<8x128xf32>
    %179 = vector.extract_strided_slice %169 {offsets = [0, 128], sizes = [8, 128], strides = [1, 1]} : vector<8x384xf32> to vector<8x128xf32>
    %180 = vector.extract_strided_slice %170 {offsets = [0, 128], sizes = [8, 128], strides = [1, 1]} : vector<8x384xf32> to vector<8x128xf32>
    %181 = arith.addf %179, %180 : vector<8x128xf32>
    %182 = arith.negf %181 : vector<8x128xf32>
    %183 = math.exp %182 : vector<8x128xf32>
    %cst_64 = arith.constant 1.000000e+00 : f32
    %184 = vector.broadcast %cst_64 : f32 to vector<8x128xf32>
    %185 = arith.addf %184, %183 : vector<8x128xf32>
    %186 = arith.divf %184, %185 : vector<8x128xf32>
    %187 = vector.extract_strided_slice %169 {offsets = [0, 256], sizes = [8, 128], strides = [1, 1]} : vector<8x384xf32> to vector<8x128xf32>
    %188 = vector.extract_strided_slice %170 {offsets = [0, 256], sizes = [8, 128], strides = [1, 1]} : vector<8x384xf32> to vector<8x128xf32>
    %189 = arith.addf %188, %164 : vector<8x128xf32>
    %190 = arith.mulf %178, %189 : vector<8x128xf32>
    %191 = arith.addf %187, %190 : vector<8x128xf32>
    %192 = math.tanh %191 : vector<8x128xf32>
    %cst_65 = arith.constant 1.000000e+00 : f32
    %193 = vector.broadcast %cst_65 : f32 to vector<8x128xf32>
    %194 = arith.subf %193, %186 : vector<8x128xf32>
    %195 = arith.mulf %194, %192 : vector<8x128xf32>
    %196 = arith.mulf %186, %166 : vector<8x128xf32>
    %197 = arith.addf %195, %196 : vector<8x128xf32>
    %c1_i32_66 = arith.constant 1 : i32
    %198 = arith.index_cast %c1_i32_66 : i32 to index
    %c0_67 = arith.constant 0 : index
    %c0_68 = arith.constant 0 : index
    %199 = vector.load %arg14[%198, %c0_67, %c0_68] : memref<4x8x384xf32, #tpu.memory_space<vmem>>, vector<1x8x384xf32>
    %200 = vector.shape_cast %199 : vector<1x8x384xf32> to vector<8x384xf32>
    %cst_69 = arith.constant dense<0.000000e+00> : vector<8x384xf32>
    %201 = tpu.matmul %197, %161, %cst_69 {dimension_numbers = #tpu.dot_dimension_numbers<[1], [0], [0], [1], [0, 0, 1, 1], [], []>} : vector<8x128xf32>, vector<128x384xf32>, vector<8x384xf32> -> vector<8x384xf32>
    %202 = vector.extract_strided_slice %200 {offsets = [0, 0], sizes = [8, 128], strides = [1, 1]} : vector<8x384xf32> to vector<8x128xf32>
    %203 = vector.extract_strided_slice %201 {offsets = [0, 0], sizes = [8, 128], strides = [1, 1]} : vector<8x384xf32> to vector<8x128xf32>
    %204 = arith.addf %202, %203 : vector<8x128xf32>
    %205 = arith.negf %204 : vector<8x128xf32>
    %206 = math.exp %205 : vector<8x128xf32>
    %cst_70 = arith.constant 1.000000e+00 : f32
    %207 = vector.broadcast %cst_70 : f32 to vector<8x128xf32>
    %208 = arith.addf %207, %206 : vector<8x128xf32>
    %209 = arith.divf %207, %208 : vector<8x128xf32>
    %210 = vector.extract_strided_slice %200 {offsets = [0, 128], sizes = [8, 128], strides = [1, 1]} : vector<8x384xf32> to vector<8x128xf32>
    %211 = vector.extract_strided_slice %201 {offsets = [0, 128], sizes = [8, 128], strides = [1, 1]} : vector<8x384xf32> to vector<8x128xf32>
    %212 = arith.addf %210, %211 : vector<8x128xf32>
    %213 = arith.negf %212 : vector<8x128xf32>
    %214 = math.exp %213 : vector<8x128xf32>
    %cst_71 = arith.constant 1.000000e+00 : f32
    %215 = vector.broadcast %cst_71 : f32 to vector<8x128xf32>
    %216 = arith.addf %215, %214 : vector<8x128xf32>
    %217 = arith.divf %215, %216 : vector<8x128xf32>
    %218 = vector.extract_strided_slice %200 {offsets = [0, 256], sizes = [8, 128], strides = [1, 1]} : vector<8x384xf32> to vector<8x128xf32>
    %219 = vector.extract_strided_slice %201 {offsets = [0, 256], sizes = [8, 128], strides = [1, 1]} : vector<8x384xf32> to vector<8x128xf32>
    %220 = arith.addf %219, %164 : vector<8x128xf32>
    %221 = arith.mulf %209, %220 : vector<8x128xf32>
    %222 = arith.addf %218, %221 : vector<8x128xf32>
    %223 = math.tanh %222 : vector<8x128xf32>
    %cst_72 = arith.constant 1.000000e+00 : f32
    %224 = vector.broadcast %cst_72 : f32 to vector<8x128xf32>
    %225 = arith.subf %224, %217 : vector<8x128xf32>
    %226 = arith.mulf %225, %223 : vector<8x128xf32>
    %227 = arith.mulf %217, %197 : vector<8x128xf32>
    %228 = arith.addf %226, %227 : vector<8x128xf32>
    %c2_i32_73 = arith.constant 2 : i32
    %229 = arith.index_cast %c2_i32_73 : i32 to index
    %c0_74 = arith.constant 0 : index
    %c0_75 = arith.constant 0 : index
    %230 = vector.load %arg14[%229, %c0_74, %c0_75] : memref<4x8x384xf32, #tpu.memory_space<vmem>>, vector<1x8x384xf32>
    %231 = vector.shape_cast %230 : vector<1x8x384xf32> to vector<8x384xf32>
    %cst_76 = arith.constant dense<0.000000e+00> : vector<8x384xf32>
    %232 = tpu.matmul %228, %161, %cst_76 {dimension_numbers = #tpu.dot_dimension_numbers<[1], [0], [0], [1], [0, 0, 1, 1], [], []>} : vector<8x128xf32>, vector<128x384xf32>, vector<8x384xf32> -> vector<8x384xf32>
    %233 = vector.extract_strided_slice %231 {offsets = [0, 0], sizes = [8, 128], strides = [1, 1]} : vector<8x384xf32> to vector<8x128xf32>
    %234 = vector.extract_strided_slice %232 {offsets = [0, 0], sizes = [8, 128], strides = [1, 1]} : vector<8x384xf32> to vector<8x128xf32>
    %235 = arith.addf %233, %234 : vector<8x128xf32>
    %236 = arith.negf %235 : vector<8x128xf32>
    %237 = math.exp %236 : vector<8x128xf32>
    %cst_77 = arith.constant 1.000000e+00 : f32
    %238 = vector.broadcast %cst_77 : f32 to vector<8x128xf32>
    %239 = arith.addf %238, %237 : vector<8x128xf32>
    %240 = arith.divf %238, %239 : vector<8x128xf32>
    %241 = vector.extract_strided_slice %231 {offsets = [0, 128], sizes = [8, 128], strides = [1, 1]} : vector<8x384xf32> to vector<8x128xf32>
    %242 = vector.extract_strided_slice %232 {offsets = [0, 128], sizes = [8, 128], strides = [1, 1]} : vector<8x384xf32> to vector<8x128xf32>
    %243 = arith.addf %241, %242 : vector<8x128xf32>
    %244 = arith.negf %243 : vector<8x128xf32>
    %245 = math.exp %244 : vector<8x128xf32>
    %cst_78 = arith.constant 1.000000e+00 : f32
    %246 = vector.broadcast %cst_78 : f32 to vector<8x128xf32>
    %247 = arith.addf %246, %245 : vector<8x128xf32>
    %248 = arith.divf %246, %247 : vector<8x128xf32>
    %249 = vector.extract_strided_slice %231 {offsets = [0, 256], sizes = [8, 128], strides = [1, 1]} : vector<8x384xf32> to vector<8x128xf32>
    %250 = vector.extract_strided_slice %232 {offsets = [0, 256], sizes = [8, 128], strides = [1, 1]} : vector<8x384xf32> to vector<8x128xf32>
    %251 = arith.addf %250, %164 : vector<8x128xf32>
    %252 = arith.mulf %240, %251 : vector<8x128xf32>
    %253 = arith.addf %249, %252 : vector<8x128xf32>
    %254 = math.tanh %253 : vector<8x128xf32>
    %cst_79 = arith.constant 1.000000e+00 : f32
    %255 = vector.broadcast %cst_79 : f32 to vector<8x128xf32>
    %256 = arith.subf %255, %248 : vector<8x128xf32>
    %257 = arith.mulf %256, %254 : vector<8x128xf32>
    %258 = arith.mulf %248, %228 : vector<8x128xf32>
    %259 = arith.addf %257, %258 : vector<8x128xf32>
    %c3_i32_80 = arith.constant 3 : i32
    %260 = arith.index_cast %c3_i32_80 : i32 to index
    %c0_81 = arith.constant 0 : index
    %c0_82 = arith.constant 0 : index
    %261 = vector.load %arg14[%260, %c0_81, %c0_82] : memref<4x8x384xf32, #tpu.memory_space<vmem>>, vector<1x8x384xf32>
    %262 = vector.shape_cast %261 : vector<1x8x384xf32> to vector<8x384xf32>
    %cst_83 = arith.constant dense<0.000000e+00> : vector<8x384xf32>
    %263 = tpu.matmul %259, %161, %cst_83 {dimension_numbers = #tpu.dot_dimension_numbers<[1], [0], [0], [1], [0, 0, 1, 1], [], []>} : vector<8x128xf32>, vector<128x384xf32>, vector<8x384xf32> -> vector<8x384xf32>
    %264 = vector.extract_strided_slice %262 {offsets = [0, 0], sizes = [8, 128], strides = [1, 1]} : vector<8x384xf32> to vector<8x128xf32>
    %265 = vector.extract_strided_slice %263 {offsets = [0, 0], sizes = [8, 128], strides = [1, 1]} : vector<8x384xf32> to vector<8x128xf32>
    %266 = arith.addf %264, %265 : vector<8x128xf32>
    %267 = arith.negf %266 : vector<8x128xf32>
    %268 = math.exp %267 : vector<8x128xf32>
    %cst_84 = arith.constant 1.000000e+00 : f32
    %269 = vector.broadcast %cst_84 : f32 to vector<8x128xf32>
    %270 = arith.addf %269, %268 : vector<8x128xf32>
    %271 = arith.divf %269, %270 : vector<8x128xf32>
    %272 = vector.extract_strided_slice %262 {offsets = [0, 128], sizes = [8, 128], strides = [1, 1]} : vector<8x384xf32> to vector<8x128xf32>
    %273 = vector.extract_strided_slice %263 {offsets = [0, 128], sizes = [8, 128], strides = [1, 1]} : vector<8x384xf32> to vector<8x128xf32>
    %274 = arith.addf %272, %273 : vector<8x128xf32>
    %275 = arith.negf %274 : vector<8x128xf32>
    %276 = math.exp %275 : vector<8x128xf32>
    %cst_85 = arith.constant 1.000000e+00 : f32
    %277 = vector.broadcast %cst_85 : f32 to vector<8x128xf32>
    %278 = arith.addf %277, %276 : vector<8x128xf32>
    %279 = arith.divf %277, %278 : vector<8x128xf32>
    %280 = vector.extract_strided_slice %262 {offsets = [0, 256], sizes = [8, 128], strides = [1, 1]} : vector<8x384xf32> to vector<8x128xf32>
    %281 = vector.extract_strided_slice %263 {offsets = [0, 256], sizes = [8, 128], strides = [1, 1]} : vector<8x384xf32> to vector<8x128xf32>
    %282 = arith.addf %281, %164 : vector<8x128xf32>
    %283 = arith.mulf %271, %282 : vector<8x128xf32>
    %284 = arith.addf %280, %283 : vector<8x128xf32>
    %285 = math.tanh %284 : vector<8x128xf32>
    %cst_86 = arith.constant 1.000000e+00 : f32
    %286 = vector.broadcast %cst_86 : f32 to vector<8x128xf32>
    %287 = arith.subf %286, %279 : vector<8x128xf32>
    %288 = arith.mulf %287, %285 : vector<8x128xf32>
    %289 = arith.mulf %279, %259 : vector<8x128xf32>
    %290 = arith.addf %288, %289 : vector<8x128xf32>
    %c4_i32_87 = arith.constant 4 : i32
    %c1_88 = arith.constant 1 : index
    %c0_89 = arith.constant 0 : index
    %c0_90 = arith.constant 0 : index
    %291 = vector.load %arg12[%c1_88, %c0_89, %c0_90] : memref<2x8x128xf32, #tpu.memory_space<vmem>>, vector<1x8x128xf32>
    %292 = vector.shape_cast %291 : vector<1x8x128xf32> to vector<8x128xf32>
    %293 = vector.shape_cast %290 : vector<8x128xf32> to vector<1x8x128xf32>
    tpu.vector_store %arg12[%c1_88, %c0_89, %c0_90], %293 {strides = array<i32>} : memref<2x8x128xf32, #tpu.memory_space<vmem>>, vector<1x8x128xf32>,
    %c0_91 = arith.constant 0 : index
    %c0_92 = arith.constant 0 : index
    %294 = vector.load %arg9[%c0_91, %c0_92] : memref<1x128xf32, #tpu.memory_space<vmem>>, vector<1x128xf32>
    %295 = vector.broadcast %294 : vector<1x128xf32> to vector<8x128xf32>
    %296 = arith.mulf %290, %295 : vector<8x128xf32>
    %cst_93 = arith.constant dense<0.000000e+00> : vector<8xf32>
    %297 = vector.multi_reduction <add>, %296, %cst_93 [1] : vector<8x128xf32> to vector<8xf32>
    %298 = vector.shape_cast %297 : vector<8xf32> to vector<8x1xf32>
    %c0_94 = arith.constant 0 : index
    %c0_95 = arith.constant 0 : index
    %299 = vector.load %arg10[%c0_94, %c0_95] : memref<1x1xf32, #tpu.memory_space<vmem>>, vector<1x1xf32>
    %300 = vector.broadcast %299 : vector<1x1xf32> to vector<8x1xf32>
    %301 = arith.addf %298, %300 : vector<8x1xf32>
    %c0_96 = arith.constant 0 : index
    %c0_97 = arith.constant 0 : index
    %302 = vector.load %arg11[%c0_96, %c0_97] : memref<8x1xf32, #tpu.memory_space<vmem>>, vector<8x1xf32>
    tpu.vector_store %arg11[%c0_96, %c0_97], %301 {strides = array<i32>} : memref<8x1xf32, #tpu.memory_space<vmem>>, vector<8x1xf32>,
    return
  }
  func.func @transform_0(%arg0: i32, %arg1: i32) -> (i32, i32, i32) {
    %c0_i32 = arith.constant 0 : i32
    %c0_i32_0 = arith.constant 0 : i32
    return %arg1, %arg0, %c0_i32 : i32, i32, i32
  }
  func.func @transform_1(%arg0: i32, %arg1: i32) -> (i32, i32) {
    %c0_i32 = arith.constant 0 : i32
    %c0_i32_0 = arith.constant 0 : i32
    %c0_i32_1 = arith.constant 0 : i32
    return %c0_i32, %c0_i32_0 : i32, i32
  }
  func.func @transform_2(%arg0: i32, %arg1: i32) -> (i32, i32) {
    %c0_i32 = arith.constant 0 : i32
    %c0_i32_0 = arith.constant 0 : i32
    %c0_i32_1 = arith.constant 0 : i32
    return %c0_i32, %c0_i32_0 : i32, i32
  }
  func.func @transform_3(%arg0: i32, %arg1: i32) -> (i32, i32) {
    %c0_i32 = arith.constant 0 : i32
    %c0_i32_0 = arith.constant 0 : i32
    %c0_i32_1 = arith.constant 0 : i32
    return %c0_i32, %c0_i32_0 : i32, i32
  }
  func.func @transform_4(%arg0: i32, %arg1: i32) -> (i32, i32) {
    %c0_i32 = arith.constant 0 : i32
    %c0_i32_0 = arith.constant 0 : i32
    %c0_i32_1 = arith.constant 0 : i32
    return %c0_i32, %c0_i32_0 : i32, i32
  }
  func.func @transform_5(%arg0: i32, %arg1: i32) -> (i32, i32) {
    %c0_i32 = arith.constant 0 : i32
    %c0_i32_0 = arith.constant 0 : i32
    %c0_i32_1 = arith.constant 0 : i32
    return %c0_i32, %c0_i32_0 : i32, i32
  }
  func.func @transform_6(%arg0: i32, %arg1: i32) -> (i32, i32) {
    %c0_i32 = arith.constant 0 : i32
    %c0_i32_0 = arith.constant 0 : i32
    %c0_i32_1 = arith.constant 0 : i32
    return %c0_i32, %c0_i32_0 : i32, i32
  }
  func.func @transform_7(%arg0: i32, %arg1: i32) -> (i32, i32) {
    %c0_i32 = arith.constant 0 : i32
    %c0_i32_0 = arith.constant 0 : i32
    %c0_i32_1 = arith.constant 0 : i32
    return %c0_i32, %c0_i32_0 : i32, i32
  }
  func.func @transform_8(%arg0: i32, %arg1: i32) -> (i32, i32) {
    %c0_i32 = arith.constant 0 : i32
    %c0_i32_0 = arith.constant 0 : i32
    %c0_i32_1 = arith.constant 0 : i32
    return %c0_i32, %c0_i32_0 : i32, i32
  }
  func.func @transform_9(%arg0: i32, %arg1: i32) -> (i32, i32) {
    %c0_i32 = arith.constant 0 : i32
    %c0_i32_0 = arith.constant 0 : i32
    return %arg0, %c0_i32 : i32, i32
  }
}

</mosaic_0001>

<llo_original>
// kernel: tpu_custom_call.1
$region0: #{tpu_custom_call.1}
  #allocation0 [shape = 'u32[]', space=smem, size = 0x4, offset = 0x4, fixed_abs, tag = 'smem constant byte address 0x4 - core index']
  #allocation1 [shape = 'u32[144,128]{1,0:T(1,128)}', space=vmem, size = 0x12000, scoped, tag = 'internal scratch']
  #allocation2 [shape = 'f32[2,8,128]{2,1,0:T(8,128)}', space=vmem, size = 0x2000, scoped, tag = 'scratch operand']
  #allocation3 [shape = 'f32[4,8,128]{2,1,0:T(8,128)}', space=vmem, size = 0x4000, scoped, tag = 'scratch operand']
  #allocation4 [shape = 'f32[4,8,384]{2,1,0:T(8,128)}', space=vmem, size = 0xc000, scoped, tag = 'scratch operand']
  #allocation5 [shape = 'f32[1,1]{1,0:T(1,128)S(1)}', space=vmem, size = 0x200, scoped, tag = 'scoped memory for tpu_custom_call.1']
  %s0 = inlined_call_operand.hbm [shape: f32[8,8,384], index: 0, kind: input, shape index: {}]
  %s1 = inlined_call_operand.hbm [shape: f32[128,384], index: 1, kind: input, shape index: {}]
  %s2 = inlined_call_operand.vmem [shape: f32[1,128], index: 2, kind: input, shape index: {}]
  %s3 = inlined_call_operand.hbm [shape: f32[128,384], index: 3, kind: input, shape index: {}]
  %s4 = inlined_call_operand.vmem [shape: f32[1,384], index: 4, kind: input, shape index: {}]
  %s5 = inlined_call_operand.hbm [shape: f32[128,384], index: 5, kind: input, shape index: {}]
  %s6 = inlined_call_operand.vmem [shape: f32[1,128], index: 6, kind: input, shape index: {}]
  %s7 = inlined_call_operand.vmem [shape: f32[1,128], index: 7, kind: input, shape index: {}]
  %s8 = inlined_call_operand.<no memory space> [shape: f32[1,1], index: 8, kind: input, shape index: {}]
  %s9 = inlined_call_operand.vmem [shape: f32[8,1], index: 9, kind: output, shape index: {}]
  %s10 = sld [smem:[#allocation0]]
  $region89: #{tpu_custom_call.1} parent=0
    _
  %s12 = ssub.s32 1, %s10
  %s13 = scalar_select 0, %s12, %s10
  %v14 = vstv %s8
  %15 = vst [vmem:[#allocation5] sm:$0x1] %v14
  $region1: #{tpu_custom_call.1} parent=0
    #allocation6 [shape = 'u8[98304]{0}', space=vmem, size = 0x18000, scoped, tag = 'input window, operand 0']
    #allocation7 [shape = 's32[2]{0}', space=sflag, size = 0x8, scoped, tag = 'scoped memory for tpu_custom_call.1']
    #allocation8 [shape = 'u8[196608]{0}', space=vmem, size = 0x30000, scoped, tag = 'input window, operand 1, single buffered']
    #allocation9 [shape = 's32[1]{0}', space=sflag, size = 0x4, scoped, tag = 'scoped memory for tpu_custom_call.1']
    #allocation10 [shape = 'u8[196608]{0}', space=vmem, size = 0x30000, scoped, tag = 'input window, operand 3, single buffered']
    #allocation11 [shape = 'u8[196608]{0}', space=vmem, size = 0x30000, scoped, tag = 'input window, operand 5, single buffered']
    #allocation12 [shape = 's32[1]{0}', space=sflag, size = 0x4, scoped, tag = 'scoped memory for tpu_custom_call.1']
    %16 = vsyncpa [#allocation7], 0
    %s17 = scalar_lea.sflag [#allocation7], 1
    %18 = vsyncpa %s17, 0
    %19 = vsyncpa [#allocation9], 0
    %20 = vsyncpa [#allocation12], 0
    loop: start=0, step=1, limit=4
    $region2: #{tpu_custom_call.1} parent=1 // loop_pre_header
      _
    $region3: #{tpu_custom_call.1} parent=1 // loop_header
      %s22 = sphi 0, %s26
      %p23 = scmp.ge.s32.totalorder %s22, 4
      %s29 = sphi 0, %s41
      %s30 = sphi 0, %s37
      %s31 = sphi 0, %s29
      %s32 = sphi 0, %s30
      %s33 = sphi 0, %s31
      %s34 = sphi 0, %s32
      %s46 = sphi 0, %s48
      %s49 = sphi 0, %s46
      %s50 = sphi 0, %s49
      %s66 = sphi 0, %s50
      %s70 = sphi 0, %s70
      %s72 = sphi 0, %s70
      %s73 = sphi 0, %s72
      %s87 = sphi 0, %s73
      %s91 = sphi 0, %s91
      %s93 = sphi 0, %s91
      %s94 = sphi 0, %s93
      %s108 = sphi 0, %s94
      %s112 = sphi 0, %s112
      %s114 = sphi 0, %s112
      %s115 = sphi 0, %s114
      %s129 = sphi 0, %s115
      %s133 = sphi 0, %s133
      %s135 = sphi 0, %s133
      %s136 = sphi 0, %s135
      %s150 = sphi 0, %s136
      %s154 = sphi 0, %s154
      %s156 = sphi 0, %s154
      %s157 = sphi 0, %s156
      %s171 = sphi 0, %s157
      %s175 = sphi 0, %s175
      %s177 = sphi 0, %s175
      %s178 = sphi 0, %s177
      %s192 = sphi 0, %s178
      %s196 = sphi 0, %s196
      %s198 = sphi 0, %s196
      %s199 = sphi 0, %s198
      %s213 = sphi 0, %s199
      %s217 = sphi 0, %s217
      %s219 = sphi 0, %s217
      %s220 = sphi 0, %s219
      %s234 = sphi 0, %s220
      %s240 = sphi 0, %s242
      %s243 = sphi 0, %s240
      %s244 = sphi 0, %s243
      %s260 = sphi 0, %s244
    $region4: #{tpu_custom_call.1} parent=1 // loop_header_branch
      %25 = sbr.rel (%p23) target = $region8
    $region5: #{tpu_custom_call.1} parent=1 // loop_body
      %s27 = ssub.s32 %s22, 1
      %s28 = ssub.s32 %s22, 2
      %s35 = sadd.s32 1, %s30
      %p36 = scmp.ge.s32.totalorder %s35, 2
      %s37 = scalar_select %p36, 0, %s35
      %s38 = sadd.s32 1, %s29
      %s39 = scalar_select %p36, %s38, %s29
      %p40 = scmp.ge.s32.totalorder %s39, 1
      %s41 = scalar_select %p40, 0, %s39
      %s42 = ssub.s32 %s30, %s37
      %s43 = ssub.s32 %s29, %s41
      %s44 = sor.u32 %s42, %s43
      %p45 = scmp.eq.s32.totalorder %s44, 0
      %s47 = sadd.s32 %s46, 1
      %s48 = scalar_select %p45, %s46, %s47
      %p51 = pneg %p45
      %p52 = scmp.eq.s32.totalorder %s22, 1
      %p53 = por %p51, %p52
      %p54 = scmp.ne.s32.totalorder %s46, %s49
      %p55 = scmp.eq.s32.totalorder %s22, 0
      %p56 = por %p54, %p55
      %p57 = scmp.ne.s32.totalorder %s46, %s49
      %p58 = scmp.eq.s32.totalorder %s27, 1
      %p59 = por %p57, %p58
      %p60 = scmp.ne.s32.totalorder %s49, %s50
      %p61 = scmp.eq.s32.totalorder %s27, 0
      %p62 = por %p60, %p61
      %p63 = scmp.ne.s32.totalorder %s49, %s50
      %p64 = scmp.eq.s32.totalorder %s28, 1
      %p65 = por %p63, %p64
      %p67 = scmp.ne.s32.totalorder %s50, %s66
      %p68 = scmp.eq.s32.totalorder %s28, 0
      %p69 = por %p67, %p68
      %s71 = sadd.s32 %s70, 1
      %p74 = scmp.eq.s32.totalorder %s22, 1
      %p75 = scmp.ne.s32.totalorder %s70, %s72
      %p76 = scmp.eq.s32.totalorder %s22, 0
      %p77 = por %p75, %p76
      %p78 = scmp.ne.s32.totalorder %s70, %s72
      %p79 = scmp.eq.s32.totalorder %s27, 1
      %p80 = por %p78, %p79
      %p81 = scmp.ne.s32.totalorder %s72, %s73
      %p82 = scmp.eq.s32.totalorder %s27, 0
      %p83 = por %p81, %p82
      %p84 = scmp.ne.s32.totalorder %s72, %s73
      %p85 = scmp.eq.s32.totalorder %s28, 1
      %p86 = por %p84, %p85
      %p88 = scmp.ne.s32.totalorder %s73, %s87
      %p89 = scmp.eq.s32.totalorder %s28, 0
      %p90 = por %p88, %p89
      %s92 = sadd.s32 %s91, 1
      %p95 = scmp.eq.s32.totalorder %s22, 1
      %p96 = scmp.ne.s32.totalorder %s91, %s93
      %p97 = scmp.eq.s32.totalorder %s22, 0
      %p98 = por %p96, %p97
      %p99 = scmp.ne.s32.totalorder %s91, %s93
      %p100 = scmp.eq.s32.totalorder %s27, 1
      %p101 = por %p99, %p100
      %p102 = scmp.ne.s32.totalorder %s93, %s94
      %p103 = scmp.eq.s32.totalorder %s27, 0
      %p104 = por %p102, %p103
      %p105 = scmp.ne.s32.totalorder %s93, %s94
      %p106 = scmp.eq.s32.totalorder %s28, 1
      %p107 = por %p105, %p106
      %p109 = scmp.ne.s32.totalorder %s94, %s108
      %p110 = scmp.eq.s32.totalorder %s28, 0
      %p111 = por %p109, %p110
      %s113 = sadd.s32 %s112, 1
      %p116 = scmp.eq.s32.totalorder %s22, 1
      %p117 = scmp.ne.s32.totalorder %s112, %s114
      %p118 = scmp.eq.s32.totalorder %s22, 0
      %p119 = por %p117, %p118
      %p120 = scmp.ne.s32.totalorder %s112, %s114
      %p121 = scmp.eq.s32.totalorder %s27, 1
      %p122 = por %p120, %p121
      %p123 = scmp.ne.s32.totalorder %s114, %s115
      %p124 = scmp.eq.s32.totalorder %s27, 0
      %p125 = por %p123, %p124
      %p126 = scmp.ne.s32.totalorder %s114, %s115
      %p127 = scmp.eq.s32.totalorder %s28, 1
      %p128 = por %p126, %p127
      %p130 = scmp.ne.s32.totalorder %s115, %s129
      %p131 = scmp.eq.s32.totalorder %s28, 0
      %p132 = por %p130, %p131
      %s134 = sadd.s32 %s133, 1
      %p137 = scmp.eq.s32.totalorder %s22, 1
      %p138 = scmp.ne.s32.totalorder %s133, %s135
      %p139 = scmp.eq.s32.totalorder %s22, 0
      %p140 = por %p138, %p139
      %p141 = scmp.ne.s32.totalorder %s133, %s135
      %p142 = scmp.eq.s32.totalorder %s27, 1
      %p143 = por %p141, %p142
      %p144 = scmp.ne.s32.totalorder %s135, %s136
      %p145 = scmp.eq.s32.totalorder %s27, 0
      %p146 = por %p144, %p145
      %p147 = scmp.ne.s32.totalorder %s135, %s136
      %p148 = scmp.eq.s32.totalorder %s28, 1
      %p149 = por %p147, %p148
      %p151 = scmp.ne.s32.totalorder %s136, %s150
      %p152 = scmp.eq.s32.totalorder %s28, 0
      %p153 = por %p151, %p152
      %s155 = sadd.s32 %s154, 1
      %p158 = scmp.eq.s32.totalorder %s22, 1
      %p159 = scmp.ne.s32.totalorder %s154, %s156
      %p160 = scmp.eq.s32.totalorder %s22, 0
      %p161 = por %p159, %p160
      %p162 = scmp.ne.s32.totalorder %s154, %s156
      %p163 = scmp.eq.s32.totalorder %s27, 1
      %p164 = por %p162, %p163
      %p165 = scmp.ne.s32.totalorder %s156, %s157
      %p166 = scmp.eq.s32.totalorder %s27, 0
      %p167 = por %p165, %p166
      %p168 = scmp.ne.s32.totalorder %s156, %s157
      %p169 = scmp.eq.s32.totalorder %s28, 1
      %p170 = por %p168, %p169
      %p172 = scmp.ne.s32.totalorder %s157, %s171
      %p173 = scmp.eq.s32.totalorder %s28, 0
      %p174 = por %p172, %p173
      %s176 = sadd.s32 %s175, 1
      %p179 = scmp.eq.s32.totalorder %s22, 1
      %p180 = scmp.ne.s32.totalorder %s175, %s177
      %p181 = scmp.eq.s32.totalorder %s22, 0
      %p182 = por %p180, %p181
      %p183 = scmp.ne.s32.totalorder %s175, %s177
      %p184 = scmp.eq.s32.totalorder %s27, 1
      %p185 = por %p183, %p184
      %p186 = scmp.ne.s32.totalorder %s177, %s178
      %p187 = scmp.eq.s32.totalorder %s27, 0
      %p188 = por %p186, %p187
      %p189 = scmp.ne.s32.totalorder %s177, %s178
      %p190 = scmp.eq.s32.totalorder %s28, 1
      %p191 = por %p189, %p190
      %p193 = scmp.ne.s32.totalorder %s178, %s192
      %p194 = scmp.eq.s32.totalorder %s28, 0
      %p195 = por %p193, %p194
      %s197 = sadd.s32 %s196, 1
      %p200 = scmp.eq.s32.totalorder %s22, 1
      %p201 = scmp.ne.s32.totalorder %s196, %s198
      %p202 = scmp.eq.s32.totalorder %s22, 0
      %p203 = por %p201, %p202
      %p204 = scmp.ne.s32.totalorder %s196, %s198
      %p205 = scmp.eq.s32.totalorder %s27, 1
      %p206 = por %p204, %p205
      %p207 = scmp.ne.s32.totalorder %s198, %s199
      %p208 = scmp.eq.s32.totalorder %s27, 0
      %p209 = por %p207, %p208
      %p210 = scmp.ne.s32.totalorder %s198, %s199
      %p211 = scmp.eq.s32.totalorder %s28, 1
      %p212 = por %p210, %p211
      %p214 = scmp.ne.s32.totalorder %s199, %s213
      %p215 = scmp.eq.s32.totalorder %s28, 0
      %p216 = por %p214, %p215
      %s218 = sadd.s32 %s217, 1
      %p221 = scmp.eq.s32.totalorder %s22, 1
      %p222 = scmp.ne.s32.totalorder %s217, %s219
      %p223 = scmp.eq.s32.totalorder %s22, 0
      %p224 = por %p222, %p223
      %p225 = scmp.ne.s32.totalorder %s217, %s219
      %p226 = scmp.eq.s32.totalorder %s27, 1
      %p227 = por %p225, %p226
      %p228 = scmp.ne.s32.totalorder %s219, %s220
      %p229 = scmp.eq.s32.totalorder %s27, 0
      %p230 = por %p228, %p229
      %p231 = scmp.ne.s32.totalorder %s219, %s220
      %p232 = scmp.eq.s32.totalorder %s28, 1
      %p233 = por %p231, %p232
      %p235 = scmp.ne.s32.totalorder %s220, %s234
      %p236 = scmp.eq.s32.totalorder %s28, 0
      %p237 = por %p235, %p236
      %s238 = ssub.s32 %s29, %s41
      %p239 = scmp.eq.s32.totalorder %s238, 0
      %s241 = sadd.s32 %s240, 1
      %s242 = scalar_select %p239, %s240, %s241
      %p245 = pneg %p239
      %p246 = scmp.eq.s32.totalorder %s22, 1
      %p247 = por %p245, %p246
      %p248 = scmp.ne.s32.totalorder %s240, %s243
      %p249 = scmp.eq.s32.totalorder %s22, 0
      %p250 = por %p248, %p249
      %p251 = scmp.ne.s32.totalorder %s240, %s243
      %p252 = scmp.eq.s32.totalorder %s27, 1
      %p253 = por %p251, %p252
      %p254 = scmp.ne.s32.totalorder %s243, %s244
      %p255 = scmp.eq.s32.totalorder %s27, 0
      %p256 = por %p254, %p255
      %p257 = scmp.ne.s32.totalorder %s243, %s244
      %p258 = scmp.eq.s32.totalorder %s28, 1
      %p259 = por %p257, %p258
      %p261 = scmp.ne.s32.totalorder %s244, %s260
      %p262 = scmp.eq.s32.totalorder %s28, 0
      %p263 = por %p261, %p262
      %p264 = scmp.le.s32.totalorder 1, %s22
      %p265 = scmp.lt.s32.totalorder %s22, 3
      %p266 = pnand %p264, %p265
      %p267 = pneg %p266
      // Predicated region
      $region9: #{tpu_custom_call.1} parent=5 // pred_check
        _
      $region10: #{tpu_custom_call.1} parent=5 // pred_check_branch
        %269 = sbr.rel (%p266) target = $region12
      $region11: #{tpu_custom_call.1} parent=5 // pred_region
        %s270 = ssub.s32 %s22, 1
        // Predicated region
        $region13: #{tpu_custom_call.1} parent=11 // pred_check
          %p271 = pneg %p83
        $region14: #{tpu_custom_call.1} parent=11 // pred_check_branch
          %273 = sbr.rel (%p271) target = $region16
        $region15: #{tpu_custom_call.1} parent=11 // pred_region
          %s275 = ssub.s32 6144, 6144
          %276 = vsyncadd [#allocation9], %s275
          %s277 = sshll.u32 [#allocation8], 4
          %s278 = int_to_ptr.vmem [resolvable:$true] %s277
          %283 = dma.hbm_to_vmem [thread:$0]  %s1, 6144, %s278, [#allocation9], 384, 384, 24
        $region16: #{tpu_custom_call.1} parent=11 // pred_fallthru
          _
        // Predicated region
        $region17: #{tpu_custom_call.1} parent=11 // pred_check
          %p284 = pneg %p104
        $region18: #{tpu_custom_call.1} parent=11 // pred_check_branch
          %286 = sbr.rel (%p284) target = $region20
        $region19: #{tpu_custom_call.1} parent=11 // pred_region
          _
        $region20: #{tpu_custom_call.1} parent=11 // pred_fallthru
          _
        // Predicated region
        $region21: #{tpu_custom_call.1} parent=11 // pred_check
          %p287 = pneg %p125
        $region22: #{tpu_custom_call.1} parent=11 // pred_check_branch
          %289 = sbr.rel (%p287) target = $region24
        $region23: #{tpu_custom_call.1} parent=11 // pred_region
          %s291 = ssub.s32 6144, 6144
          %292 = vsyncadd [#allocation9], %s291
          %s293 = sshll.u32 [#allocation10], 4
          %s294 = int_to_ptr.vmem [resolvable:$true] %s293
          %299 = dma.hbm_to_vmem [thread:$0]  %s3, 6144, %s294, [#allocation9], 384, 384, 24
        $region24: #{tpu_custom_call.1} parent=11 // pred_fallthru
          _
        // Predicated region
        $region25: #{tpu_custom_call.1} parent=11 // pred_check
          %p300 = pneg %p146
        $region26: #{tpu_custom_call.1} parent=11 // pred_check_branch
          %302 = sbr.rel (%p300) target = $region28
        $region27: #{tpu_custom_call.1} parent=11 // pred_region
          _
        $region28: #{tpu_custom_call.1} parent=11 // pred_fallthru
          _
        // Predicated region
        $region29: #{tpu_custom_call.1} parent=11 // pred_check
          %p303 = pneg %p167
        $region30: #{tpu_custom_call.1} parent=11 // pred_check_branch
          %305 = sbr.rel (%p303) target = $region32
        $region31: #{tpu_custom_call.1} parent=11 // pred_region
          %s307 = ssub.s32 6144, 6144
          %308 = vsyncadd [#allocation12], %s307
          %s309 = sshll.u32 [#allocation11], 4
          %s310 = int_to_ptr.vmem [resolvable:$true] %s309
          %315 = dma.hbm_to_vmem [thread:$0]  %s5, 6144, %s310, [#allocation12], 384, 384, 24
        $region32: #{tpu_custom_call.1} parent=11 // pred_fallthru
          _
        // Predicated region
        $region33: #{tpu_custom_call.1} parent=11 // pred_check
          %p316 = pneg %p188
        $region34: #{tpu_custom_call.1} parent=11 // pred_check_branch
          %318 = sbr.rel (%p316) target = $region36
        $region35: #{tpu_custom_call.1} parent=11 // pred_region
          _
        $region36: #{tpu_custom_call.1} parent=11 // pred_fallthru
          _
        // Predicated region
        $region37: #{tpu_custom_call.1} parent=11 // pred_check
          %p319 = pneg %p209
        $region38: #{tpu_custom_call.1} parent=11 // pred_check_branch
          %321 = sbr.rel (%p319) target = $region40
        $region39: #{tpu_custom_call.1} parent=11 // pred_region
          _
        $region40: #{tpu_custom_call.1} parent=11 // pred_fallthru
          _
        // Predicated region
        $region41: #{tpu_custom_call.1} parent=11 // pred_check
          %p322 = pneg %p230
        $region42: #{tpu_custom_call.1} parent=11 // pred_check_branch
          %324 = sbr.rel (%p322) target = $region44
        $region43: #{tpu_custom_call.1} parent=11 // pred_region
          _
        $region44: #{tpu_custom_call.1} parent=11 // pred_fallthru
          _
      $region12: #{tpu_custom_call.1} parent=5 // pred_fallthru
        _
      %p325 = scmp.lt.s32.totalorder %s22, 2
      // Predicated region
      $region45: #{tpu_custom_call.1} parent=5 // pred_check
        %p326 = pneg %p325
      $region46: #{tpu_custom_call.1} parent=5 // pred_check_branch
        %328 = sbr.rel (%p326) target = $region48
      $region47: #{tpu_custom_call.1} parent=5 // pred_region
        // Predicated region
        $region49: #{tpu_custom_call.1} parent=47 // pred_check
          %p329 = pneg %p56
        $region50: #{tpu_custom_call.1} parent=47 // pred_check_branch
          %331 = sbr.rel (%p329) target = $region52
        $region51: #{tpu_custom_call.1} parent=47 // pred_region
          %s332 = sand.u32 %s46, 1
          %s333 = scalar_lea.sflag [#allocation7], %s332
          %s334 = sand.u32 %s46, 1
          %s335 = smul.addr %s334, 96
          %s336 = scalar_lea.vmem [#allocation6], %s335
          %s337 = smul.u32 4, %s30
          %s339 = ssub.s32 1536, 1536
          %340 = vsyncadd %s333, %s339
          %s341 = smul.addr %s29, 3
          %s342 = smul.addr %s337, 3
          %s343 = sadd.s32 %s341, %s342
          %s344 = smul.addr %s343, 128
          %s345 = scalar_lea.hbm %s0, %s344
          %s346 = sshll.u32 %s336, 4
          %s347 = int_to_ptr.vmem [resolvable:$true] %s346
          %352 = dma.hbm_to_vmem [thread:$0]  %s345, 1536, %s347, %s333, 384, 384, 24
        $region52: #{tpu_custom_call.1} parent=47 // pred_fallthru
          _
      $region48: #{tpu_custom_call.1} parent=5 // pred_fallthru
        _
      %p353 = scmp.le.s32.totalorder 1, %s22
      %p354 = scmp.lt.s32.totalorder %s22, 3
      %p355 = pnand %p353, %p354
      %p356 = pneg %p355
      // Predicated region
      $region53: #{tpu_custom_call.1} parent=5 // pred_check
        _
      $region54: #{tpu_custom_call.1} parent=5 // pred_check_branch
        %358 = sbr.rel (%p355) target = $region56
      $region55: #{tpu_custom_call.1} parent=5 // pred_region
        %s359 = ssub.s32 %s22, 1
        %s360 = sand.u32 %s49, 1
        %s361 = scalar_lea.sflag [#allocation7], %s360
        %s362 = sand.u32 %s49, 1
        %s363 = smul.addr %s362, 96
        %s364 = scalar_lea.vmem [#allocation6], %s363
        // Predicated region
        $region57: #{tpu_custom_call.1} parent=55 // pred_check
          %p365 = pneg %p62
        $region58: #{tpu_custom_call.1} parent=55 // pred_check_branch
          %367 = sbr.rel (%p365) target = $region60
        $region59: #{tpu_custom_call.1} parent=55 // pred_region
          %368 = dma.done %s361, 1536
        $region60: #{tpu_custom_call.1} parent=55 // pred_fallthru
          _
        // Predicated region
        $region61: #{tpu_custom_call.1} parent=55 // pred_check
          %p369 = pneg %p83
        $region62: #{tpu_custom_call.1} parent=55 // pred_check_branch
          %371 = sbr.rel (%p369) target = $region64
        $region63: #{tpu_custom_call.1} parent=55 // pred_region
          %372 = dma.done [#allocation9], 6144
        $region64: #{tpu_custom_call.1} parent=55 // pred_fallthru
          _
        // Predicated region
        $region65: #{tpu_custom_call.1} parent=55 // pred_check
          %p373 = pneg %p125
        $region66: #{tpu_custom_call.1} parent=55 // pred_check_branch
          %375 = sbr.rel (%p373) target = $region68
        $region67: #{tpu_custom_call.1} parent=55 // pred_region
          %376 = dma.done [#allocation9], 6144
        $region68: #{tpu_custom_call.1} parent=55 // pred_fallthru
          _
        // Predicated region
        $region69: #{tpu_custom_call.1} parent=55 // pred_check
          %p377 = pneg %p167
        $region70: #{tpu_custom_call.1} parent=55 // pred_check_branch
          %379 = sbr.rel (%p377) target = $region72
        $region71: #{tpu_custom_call.1} parent=55 // pred_region
          %380 = dma.done [#allocation12], 6144
        $region72: #{tpu_custom_call.1} parent=55 // pred_fallthru
          _
        %s381 = sand.u32 %s49, 1
        %s382 = scalar_lea.sflag [#allocation7], %s381
        %s383 = sand.u32 %s49, 1
        %s384 = smul.addr %s383, 96
        %s385 = scalar_lea.vmem [#allocation6], %s384
        %p386 = pneg %p62
        %p387 = pneg %p59
        %p388 = pneg %p83
        %p389 = pneg %p80
        %p390 = pneg %p104
        %p391 = pneg %p101
        %p392 = pneg %p125
        %p393 = pneg %p122
        %p394 = pneg %p146
        %p395 = pneg %p143
        %p396 = pneg %p167
        %p397 = pneg %p164
        %p398 = pneg %p188
        %p399 = pneg %p185
        %p400 = pneg %p209
        %p401 = pneg %p206
        %p402 = pneg %p230
        %p403 = pneg %p227
        %p404 = pneg %p256
        %p405 = pneg %p253
        %p406 = scmp.lt.s32.totalorder %s31, 0
        %s407 = scalar_select %p406, %s31, 0
        %s408 = smul.addr %s407, 8
        %s409 = scalar_lea.vmem %s9, %s408
        %s410 = smul.u32 4, %s32
        %p411 = scmp.lt.s32.totalorder %s31, 0
        %s412 = scalar_select %p411, %s31, 0
        %s413 = smul.addr %s412, 8
        %s414 = scalar_lea.vmem %s9, %s413
        %p415 = scmp.eq.s32.totalorder %s32, 0
        // Predicated region
        $region73: #{tpu_custom_call.1} parent=55 // pred_check
          %p416 = pneg %p415
        $region74: #{tpu_custom_call.1} parent=55 // pred_check_branch
          %418 = sbr.rel (%p416) target = $region76
        $region75: #{tpu_custom_call.1} parent=55 // pred_region
          %419 = vst [vmem:[#allocation2] sm:$0xff] 0.0
          %420 = vst [vmem:[#allocation2 + $0x8] sm:$0xff] 0.0
        $region76: #{tpu_custom_call.1} parent=55 // pred_fallthru
          _
        %v421 = vld [vmem:[#allocation8] sm:$0xff]
        %v422 = vld [vmem:[#allocation8 + $0x8] sm:$0xff]
        %v423 = vld [vmem:[#allocation8 + $0x10] sm:$0xff]
        %v424 = vld [vmem:[#allocation8 + $0x18] sm:$0xff]
        %v425 = vld [vmem:[#allocation8 + $0x20] sm:$0xff]
        %v426 = vld [vmem:[#allocation8 + $0x28] sm:$0xff]
        %v427 = vld [vmem:[#allocation8 + $0x30] sm:$0xff]
        %v428 = vld [vmem:[#allocation8 + $0x38] sm:$0xff]
        %v429 = vld [vmem:[#allocation8 + $0x40] sm:$0xff]
        %v430 = vld [vmem:[#allocation8 + $0x48] sm:$0xff]
        %v431 = vld [vmem:[#allocation8 + $0x50] sm:$0xff]
        %v432 = vld [vmem:[#allocation8 + $0x58] sm:$0xff]
        %v433 = vld [vmem:[#allocation8 + $0x60] sm:$0xff]
        %v434 = vld [vmem:[#allocation8 + $0x68] sm:$0xff]
        %v435 = vld [vmem:[#allocation8 + $0x70] sm:$0xff]
        %v436 = vld [vmem:[#allocation8 + $0x78] sm:$0xff]
        %v437 = vld [vmem:[#allocation8 + $0x80] sm:$0xff]
        %v438 = vld [vmem:[#allocation8 + $0x88] sm:$0xff]
        %v439 = vld [vmem:[#allocation8 + $0x90] sm:$0xff]
        %v440 = vld [vmem:[#allocation8 + $0x98] sm:$0xff]
        %v441 = vld [vmem:[#allocation8 + $0xa0] sm:$0xff]
        %v442 = vld [vmem:[#allocation8 + $0xa8] sm:$0xff]
        %v443 = vld [vmem:[#allocation8 + $0xb0] sm:$0xff]
        %v444 = vld [vmem:[#allocation8 + $0xb8] sm:$0xff]
        %v445 = vld [vmem:[#allocation8 + $0xc0] sm:$0xff]
        %v446 = vld [vmem:[#allocation8 + $0xc8] sm:$0xff]
        %v447 = vld [vmem:[#allocation8 + $0xd0] sm:$0xff]
        %v448 = vld [vmem:[#allocation8 + $0xd8] sm:$0xff]
        %v449 = vld [vmem:[#allocation8 + $0xe0] sm:$0xff]
        %v450 = vld [vmem:[#allocation8 + $0xe8] sm:$0xff]
        %v451 = vld [vmem:[#allocation8 + $0xf0] sm:$0xff]
        %v452 = vld [vmem:[#allocation8 + $0xf8] sm:$0xff]
        %v453 = vld [vmem:[#allocation8 + $0x100] sm:$0xff]
        %v454 = vld [vmem:[#allocation8 + $0x108] sm:$0xff]
        %v455 = vld [vmem:[#allocation8 + $0x110] sm:$0xff]
        %v456 = vld [vmem:[#allocation8 + $0x118] sm:$0xff]
        %v457 = vld [vmem:[#allocation8 + $0x120] sm:$0xff]
        %v458 = vld [vmem:[#allocation8 + $0x128] sm:$0xff]
        %v459 = vld [vmem:[#allocation8 + $0x130] sm:$0xff]
        %v460 = vld [vmem:[#allocation8 + $0x138] sm:$0xff]
        %v461 = vld [vmem:[#allocation8 + $0x140] sm:$0xff]
        %v462 = vld [vmem:[#allocation8 + $0x148] sm:$0xff]
        %v463 = vld [vmem:[#allocation8 + $0x150] sm:$0xff]
        %v464 = vld [vmem:[#allocation8 + $0x158] sm:$0xff]
        %v465 = vld [vmem:[#allocation8 + $0x160] sm:$0xff]
        %v466 = vld [vmem:[#allocation8 + $0x168] sm:$0xff]
        %v467 = vld [vmem:[#allocation8 + $0x170] sm:$0xff]
        %v468 = vld [vmem:[#allocation8 + $0x178] sm:$0xff]
        %v469 = vld [vmem:[%s2] sm:$0x1]
        %v471 = vlaneseq
        %v472 = vshrl.u32 %v471, 7
        %v473 = vsub.s32 0, %v472
        %v474 = vrot.slane %v469, %v473
        %v476 = vld [vmem:[#allocation2] sm:$0xff]
        %v477 = vld [vmem:[%s364] sm:$0xff]
        %v478 = vld [vmem:[%s364 + $0x8] sm:$0xff]
        %v479 = vld [vmem:[%s364 + $0x10] sm:$0xff]
        %480 = vmatprep.subr.mxu0 %v422
        %481 = vmatpush1.msra.mxu0 %v421
        %482 = vmatprep.subr.mxu0 %v425
        %483 = vmatpush1.msra.mxu0 %v424
        %484 = vmatprep.subr.mxu0 %v428
        %485 = vmatpush1.msra.mxu0 %v427
        %486 = vmatprep.subr.mxu0 %v431
        %487 = vmatpush1.msra.mxu0 %v430
        %488 = vmatprep.subr.mxu0 %v434
        %489 = vmatpush1.msra.mxu0 %v433
        %490 = vmatprep.subr.mxu0 %v437
        %491 = vmatpush1.msra.mxu0 %v436
        %492 = vmatprep.subr.mxu0 %v440
        %493 = vmatpush1.msra.mxu0 %v439
        %494 = vmatprep.subr.mxu0 %v443
        %495 = vmatpush1.msra.mxu0 %v442
        %496 = vmatprep.subr.mxu0 %v446
        %497 = vmatpush1.msra.mxu0 %v445
        %498 = vmatprep.subr.mxu0 %v449
        %499 = vmatpush1.msra.mxu0 %v448
        %500 = vmatprep.subr.mxu0 %v452
        %501 = vmatpush1.msra.mxu0 %v451
        %502 = vmatprep.subr.mxu0 %v455
        %503 = vmatpush1.msra.mxu0 %v454
        %504 = vmatprep.subr.mxu0 %v458
        %505 = vmatpush1.msra.mxu0 %v457
        %506 = vmatprep.subr.mxu0 %v461
        %507 = vmatpush1.msra.mxu0 %v460
        %508 = vmatprep.subr.mxu0 %v464
        %509 = vmatpush1.msra.mxu0 %v463
        %510 = vmatprep.subr.mxu0 %v467
        %511 = vmatpush1.msra.mxu0 %v466
        %512 = vmatprep.subr.mxu0 0.0
        %513 = vmatpush1.msra.mxu0 0.0
        %514 = vmatprep.subr.mxu0 0.0
        %515 = vmatpush1.msra.mxu0 0.0
        %516 = vmatprep.subr.mxu0 0.0
        %517 = vmatpush1.msra.mxu0 0.0
        %518 = vmatprep.subr.mxu0 0.0
        %519 = vmatpush1.msra.mxu0 0.0
        %520 = vmatprep.subr.mxu0 0.0
        %521 = vmatpush1.msra.mxu0 0.0
        %522 = vmatprep.subr.mxu0 0.0
        %523 = vmatpush1.msra.mxu0 0.0
        %524 = vmatprep.subr.mxu0 0.0
        %525 = vmatpush1.msra.mxu0 0.0
        %526 = vmatprep.subr.mxu0 0.0
        %527 = vmatpush1.msra.mxu0 0.0
        %528 = vmatprep.subr.mxu0 0.0
        %529 = vmatpush1.msra.mxu0 0.0
        %530 = vmatprep.subr.mxu0 0.0
        %531 = vmatpush1.msra.mxu0 0.0
        %532 = vmatprep.subr.mxu0 0.0
        %533 = vmatpush1.msra.mxu0 0.0
        %534 = vmatprep.subr.mxu0 0.0
        %535 = vmatpush1.msra.mxu0 0.0
        %536 = vmatprep.subr.mxu0 0.0
        %537 = vmatpush1.msra.mxu0 0.0
        %538 = vmatprep.subr.mxu0 0.0
        %539 = vmatpush1.msra.mxu0 0.0
        %540 = vmatprep.subr.mxu0 0.0
        %541 = vmatpush1.msra.mxu0 0.0
        %542 = vmatprep.subr.mxu0 0.0
        %543 = vmatpush1.msra.mxu0 0.0
        %544 = vmatprep.mubr.f32.mxu0 0.0
        %545 = vmatmul.mubr.f32.gmra.mrb[0].mxu0 %v476
        %v546 = vpop.f32.mrb[0].mxu0
        %v547 = vadd.f32 0.0, %v546
        %v548 = vpop.f32.mrb[0].mxu0
        %v549 = vadd.f32 0.0, %v548
        %550 = vdwg.mxu0
        %551 = vmatprep.subr.mxu0 0.0
        %552 = vmatpush1.msra.mxu0 %v423
        %553 = vmatprep.subr.mxu0 0.0
        %554 = vmatpush1.msra.mxu0 %v426
        %555 = vmatprep.subr.mxu0 0.0
        %556 = vmatpush1.msra.mxu0 %v429
        %557 = vmatprep.subr.mxu0 0.0
        %558 = vmatpush1.msra.mxu0 %v432
        %559 = vmatprep.subr.mxu0 0.0
        %560 = vmatpush1.msra.mxu0 %v435
        %561 = vmatprep.subr.mxu0 0.0
        %562 = vmatpush1.msra.mxu0 %v438
        %563 = vmatprep.subr.mxu0 0.0
        %564 = vmatpush1.msra.mxu0 %v441
        %565 = vmatprep.subr.mxu0 0.0
        %566 = vmatpush1.msra.mxu0 %v444
        %567 = vmatprep.subr.mxu0 0.0
        %568 = vmatpush1.msra.mxu0 %v447
        %569 = vmatprep.subr.mxu0 0.0
        %570 = vmatpush1.msra.mxu0 %v450
        %571 = vmatprep.subr.mxu0 0.0
        %572 = vmatpush1.msra.mxu0 %v453
        %573 = vmatprep.subr.mxu0 0.0
        %574 = vmatpush1.msra.mxu0 %v456
        %575 = vmatprep.subr.mxu0 0.0
        %576 = vmatpush1.msra.mxu0 %v459
        %577 = vmatprep.subr.mxu0 0.0
        %578 = vmatpush1.msra.mxu0 %v462
        %579 = vmatprep.subr.mxu0 0.0
        %580 = vmatpush1.msra.mxu0 %v465
        %581 = vmatprep.subr.mxu0 0.0
        %582 = vmatpush1.msra.mxu0 %v468
        %583 = vmatprep.subr.mxu0 0.0
        %584 = vmatpush1.msra.mxu0 0.0
        %585 = vmatprep.subr.mxu0 0.0
        %586 = vmatpush1.msra.mxu0 0.0
        %587 = vmatprep.subr.mxu0 0.0
        %588 = vmatpush1.msra.mxu0 0.0
        %589 = vmatprep.subr.mxu0 0.0
        %590 = vmatpush1.msra.mxu0 0.0
        %591 = vmatprep.subr.mxu0 0.0
        %592 = vmatpush1.msra.mxu0 0.0
        %593 = vmatprep.subr.mxu0 0.0
        %594 = vmatpush1.msra.mxu0 0.0
        %595 = vmatprep.subr.mxu0 0.0
        %596 = vmatpush1.msra.mxu0 0.0
        %597 = vmatprep.subr.mxu0 0.0
        %598 = vmatpush1.msra.mxu0 0.0
        %599 = vmatprep.subr.mxu0 0.0
        %600 = vmatpush1.msra.mxu0 0.0
        %601 = vmatprep.subr.mxu0 0.0
        %602 = vmatpush1.msra.mxu0 0.0
        %603 = vmatprep.subr.mxu0 0.0
        %604 = vmatpush1.msra.mxu0 0.0
        %605 = vmatprep.subr.mxu0 0.0
        %606 = vmatpush1.msra.mxu0 0.0
        %607 = vmatprep.subr.mxu0 0.0
        %608 = vmatpush1.msra.mxu0 0.0
        %609 = vmatprep.subr.mxu0 0.0
        %610 = vmatpush1.msra.mxu0 0.0
        %611 = vmatprep.subr.mxu0 0.0
        %612 = vmatpush1.msra.mxu0 0.0
        %613 = vmatprep.subr.mxu0 0.0
        %614 = vmatpush1.msra.mxu0 0.0
        %615 = vmatprep.mubr.f32.mxu0 0.0
        %616 = vmatmul.mubr.f32.gmra.mrb[0].mxu0 %v476
        %v617 = vpop.f32.mrb[0].mxu0
        %v618 = vadd.f32 0.0, %v617
        %v619 = vpop.f32.mrb[0].mxu0
        %620 = vdwg.mxu0
        %v621 = vadd.f32 %v477, %v547
        %v622 = vxor.u32 %v621, 2147483648
        %v623 = vmul.f32 %v622, 1.442695
        %v624 = vpow.pop %v623
        %v625 = vadd.f32 %v624, 1.0
        %v626 = vrcp.pop %v625
        %v627 = vmul.f32 1.0, %v626
        %v628 = vadd.f32 %v478, %v549
        %v629 = vxor.u32 %v628, 2147483648
        %v630 = vmul.f32 %v629, 1.442695
        %v631 = vpow.pop %v630
        %v632 = vadd.f32 %v631, 1.0
        %v633 = vrcp.pop %v632
        %v634 = vmul.f32 1.0, %v633
        %v635 = vadd.f32 %v618, %v474
        %v636 = vmul.f32 %v627, %v635
        %v637 = vadd.f32 %v479, %v636
        %v638 = vtanh.pop %v637
        %v639 = vsub.f32 1.0, %v634
        %v640 = vmul.f32 %v639, %v638
        %v641 = vmul.f32 %v634, %v476
        %v642 = vadd.f32 %v640, %v641
        %643 = vst [vmem:[#allocation3] sm:$0xff] %v642
        %s644 = scalar_lea.vmem %s364, 24 [#allocation6]
        %v645 = vld [vmem:[%s644] sm:$0xff]
        %v646 = vld [vmem:[%s644 + $0x8] sm:$0xff]
        %v647 = vld [vmem:[%s644 + $0x10] sm:$0xff]
        %648 = vmatprep.subr.mxu0 %v422
        %649 = vmatpush1.msra.mxu0 %v421
        %650 = vmatprep.subr.mxu0 %v425
        %651 = vmatpush1.msra.mxu0 %v424
        %652 = vmatprep.subr.mxu0 %v428
        %653 = vmatpush1.msra.mxu0 %v427
        %654 = vmatprep.subr.mxu0 %v431
        %655 = vmatpush1.msra.mxu0 %v430
        %656 = vmatprep.subr.mxu0 %v434
        %657 = vmatpush1.msra.mxu0 %v433
        %658 = vmatprep.subr.mxu0 %v437
        %659 = vmatpush1.msra.mxu0 %v436
        %660 = vmatprep.subr.mxu0 %v440
        %661 = vmatpush1.msra.mxu0 %v439
        %662 = vmatprep.subr.mxu0 %v443
        %663 = vmatpush1.msra.mxu0 %v442
        %664 = vmatprep.subr.mxu0 %v446
        %665 = vmatpush1.msra.mxu0 %v445
        %666 = vmatprep.subr.mxu0 %v449
        %667 = vmatpush1.msra.mxu0 %v448
        %668 = vmatprep.subr.mxu0 %v452
        %669 = vmatpush1.msra.mxu0 %v451
        %670 = vmatprep.subr.mxu0 %v455
        %671 = vmatpush1.msra.mxu0 %v454
        %672 = vmatprep.subr.mxu0 %v458
        %673 = vmatpush1.msra.mxu0 %v457
        %674 = vmatprep.subr.mxu0 %v461
        %675 = vmatpush1.msra.mxu0 %v460
        %676 = vmatprep.subr.mxu0 %v464
        %677 = vmatpush1.msra.mxu0 %v463
        %678 = vmatprep.subr.mxu0 %v467
        %679 = vmatpush1.msra.mxu0 %v466
        %680 = vmatprep.subr.mxu0 0.0
        %681 = vmatpush1.msra.mxu0 0.0
        %682 = vmatprep.subr.mxu0 0.0
        %683 = vmatpush1.msra.mxu0 0.0
        %684 = vmatprep.subr.mxu0 0.0
        %685 = vmatpush1.msra.mxu0 0.0
        %686 = vmatprep.subr.mxu0 0.0
        %687 = vmatpush1.msra.mxu0 0.0
        %688 = vmatprep.subr.mxu0 0.0
        %689 = vmatpush1.msra.mxu0 0.0
        %690 = vmatprep.subr.mxu0 0.0
        %691 = vmatpush1.msra.mxu0 0.0
        %692 = vmatprep.subr.mxu0 0.0
        %693 = vmatpush1.msra.mxu0 0.0
        %694 = vmatprep.subr.mxu0 0.0
        %695 = vmatpush1.msra.mxu0 0.0
        %696 = vmatprep.subr.mxu0 0.0
        %697 = vmatpush1.msra.mxu0 0.0
        %698 = vmatprep.subr.mxu0 0.0
        %699 = vmatpush1.msra.mxu0 0.0
        %700 = vmatprep.subr.mxu0 0.0
        %701 = vmatpush1.msra.mxu0 0.0
        %702 = vmatprep.subr.mxu0 0.0
        %703 = vmatpush1.msra.mxu0 0.0
        %704 = vmatprep.subr.mxu0 0.0
        %705 = vmatpush1.msra.mxu0 0.0
        %706 = vmatprep.subr.mxu0 0.0
        %707 = vmatpush1.msra.mxu0 0.0
        %708 = vmatprep.subr.mxu0 0.0
        %709 = vmatpush1.msra.mxu0 0.0
        %710 = vmatprep.subr.mxu0 0.0
        %711 = vmatpush1.msra.mxu0 0.0
        %712 = vmatprep.mubr.f32.mxu0 0.0
        %713 = vmatmul.mubr.f32.gmra.mrb[0].mxu0 %v642
        %v714 = vpop.f32.mrb[0].mxu0
        %v715 = vadd.f32 0.0, %v714
        %v716 = vpop.f32.mrb[0].mxu0
        %v717 = vadd.f32 0.0, %v716
        %718 = vdwg.mxu0
        %719 = vmatprep.subr.mxu0 0.0
        %720 = vmatpush1.msra.mxu0 %v423
        %721 = vmatprep.subr.mxu0 0.0
        %722 = vmatpush1.msra.mxu0 %v426
        %723 = vmatprep.subr.mxu0 0.0
        %724 = vmatpush1.msra.mxu0 %v429
        %725 = vmatprep.subr.mxu0 0.0
        %726 = vmatpush1.msra.mxu0 %v432
        %727 = vmatprep.subr.mxu0 0.0
        %728 = vmatpush1.msra.mxu0 %v435
        %729 = vmatprep.subr.mxu0 0.0
        %730 = vmatpush1.msra.mxu0 %v438
        %731 = vmatprep.subr.mxu0 0.0
        %732 = vmatpush1.msra.mxu0 %v441
        %733 = vmatprep.subr.mxu0 0.0
        %734 = vmatpush1.msra.mxu0 %v444
        %735 = vmatprep.subr.mxu0 0.0
        %736 = vmatpush1.msra.mxu0 %v447
        %737 = vmatprep.subr.mxu0 0.0
        %738 = vmatpush1.msra.mxu0 %v450
        %739 = vmatprep.subr.mxu0 0.0
        %740 = vmatpush1.msra.mxu0 %v453
        %741 = vmatprep.subr.mxu0 0.0
        %742 = vmatpush1.msra.mxu0 %v456
        %743 = vmatprep.subr.mxu0 0.0
        %744 = vmatpush1.msra.mxu0 %v459
        %745 = vmatprep.subr.mxu0 0.0
        %746 = vmatpush1.msra.mxu0 %v462
        %747 = vmatprep.subr.mxu0 0.0
        %748 = vmatpush1.msra.mxu0 %v465
        %749 = vmatprep.subr.mxu0 0.0
        %750 = vmatpush1.msra.mxu0 %v468
        %751 = vmatprep.subr.mxu0 0.0
        %752 = vmatpush1.msra.mxu0 0.0
        %753 = vmatprep.subr.mxu0 0.0
        %754 = vmatpush1.msra.mxu0 0.0
        %755 = vmatprep.subr.mxu0 0.0
        %756 = vmatpush1.msra.mxu0 0.0
        %757 = vmatprep.subr.mxu0 0.0
        %758 = vmatpush1.msra.mxu0 0.0
        %759 = vmatprep.subr.mxu0 0.0
        %760 = vmatpush1.msra.mxu0 0.0
        %761 = vmatprep.subr.mxu0 0.0
        %762 = vmatpush1.msra.mxu0 0.0
        %763 = vmatprep.subr.mxu0 0.0
        %764 = vmatpush1.msra.mxu0 0.0
        %765 = vmatprep.subr.mxu0 0.0
        %766 = vmatpush1.msra.mxu0 0.0
        %767 = vmatprep.subr.mxu0 0.0
        %768 = vmatpush1.msra.mxu0 0.0
        %769 = vmatprep.subr.mxu0 0.0
        %770 = vmatpush1.msra.mxu0 0.0
        %771 = vmatprep.subr.mxu0 0.0
        %772 = vmatpush1.msra.mxu0 0.0
        %773 = vmatprep.subr.mxu0 0.0
        %774 = vmatpush1.msra.mxu0 0.0
        %775 = vmatprep.subr.mxu0 0.0
        %776 = vmatpush1.msra.mxu0 0.0
        %777 = vmatprep.subr.mxu0 0.0
        %778 = vmatpush1.msra.mxu0 0.0
        %779 = vmatprep.subr.mxu0 0.0
        %780 = vmatpush1.msra.mxu0 0.0
        %781 = vmatprep.subr.mxu0 0.0
        %782 = vmatpush1.msra.mxu0 0.0
        %783 = vmatprep.mubr.f32.mxu0 0.0
        %784 = vmatmul.mubr.f32.gmra.mrb[0].mxu0 %v642
        %v785 = vpop.f32.mrb[0].mxu0
        %v786 = vadd.f32 0.0, %v785
        %v787 = vpop.f32.mrb[0].mxu0
        %788 = vdwg.mxu0
        %v789 = vadd.f32 %v645, %v715
        %v790 = vxor.u32 %v789, 2147483648
        %v791 = vmul.f32 %v790, 1.442695
        %v792 = vpow.pop %v791
        %v793 = vadd.f32 %v792, 1.0
        %v794 = vrcp.pop %v793
        %v795 = vmul.f32 1.0, %v794
        %v796 = vadd.f32 %v646, %v717
        %v797 = vxor.u32 %v796, 2147483648
        %v798 = vmul.f32 %v797, 1.442695
        %v799 = vpow.pop %v798
        %v800 = vadd.f32 %v799, 1.0
        %v801 = vrcp.pop %v800
        %v802 = vmul.f32 1.0, %v801
        %v803 = vadd.f32 %v786, %v474
        %v804 = vmul.f32 %v795, %v803
        %v805 = vadd.f32 %v647, %v804
        %v806 = vtanh.pop %v805
        %v807 = vsub.f32 1.0, %v802
        %v808 = vmul.f32 %v807, %v806
        %v809 = vmul.f32 %v802, %v642
        %v810 = vadd.f32 %v808, %v809
        %s811 = scalar_lea.vmem [#allocation3], 8
        %812 = vst [vmem:[%s811] sm:$0xff] %v810
        %s813 = scalar_lea.vmem %s364, 48 [#allocation6]
        %v814 = vld [vmem:[%s813] sm:$0xff]
        %v815 = vld [vmem:[%s813 + $0x8] sm:$0xff]
        %v816 = vld [vmem:[%s813 + $0x10] sm:$0xff]
        %817 = vmatprep.subr.mxu0 %v422
        %818 = vmatpush1.msra.mxu0 %v421
        %819 = vmatprep.subr.mxu0 %v425
        %820 = vmatpush1.msra.mxu0 %v424
        %821 = vmatprep.subr.mxu0 %v428
        %822 = vmatpush1.msra.mxu0 %v427
        %823 = vmatprep.subr.mxu0 %v431
        %824 = vmatpush1.msra.mxu0 %v430
        %825 = vmatprep.subr.mxu0 %v434
        %826 = vmatpush1.msra.mxu0 %v433
        %827 = vmatprep.subr.mxu0 %v437
        %828 = vmatpush1.msra.mxu0 %v436
        %829 = vmatprep.subr.mxu0 %v440
        %830 = vmatpush1.msra.mxu0 %v439
        %831 = vmatprep.subr.mxu0 %v443
        %832 = vmatpush1.msra.mxu0 %v442
        %833 = vmatprep.subr.mxu0 %v446
        %834 = vmatpush1.msra.mxu0 %v445
        %835 = vmatprep.subr.mxu0 %v449
        %836 = vmatpush1.msra.mxu0 %v448
        %837 = vmatprep.subr.mxu0 %v452
        %838 = vmatpush1.msra.mxu0 %v451
        %839 = vmatprep.subr.mxu0 %v455
        %840 = vmatpush1.msra.mxu0 %v454
        %841 = vmatprep.subr.mxu0 %v458
        %842 = vmatpush1.msra.mxu0 %v457
        %843 = vmatprep.subr.mxu0 %v461
        %844 = vmatpush1.msra.mxu0 %v460
        %845 = vmatprep.subr.mxu0 %v464
        %846 = vmatpush1.msra.mxu0 %v463
        %847 = vmatprep.subr.mxu0 %v467
        %848 = vmatpush1.msra.mxu0 %v466
        %849 = vmatprep.subr.mxu0 0.0
        %850 = vmatpush1.msra.mxu0 0.0
        %851 = vmatprep.subr.mxu0 0.0
        %852 = vmatpush1.msra.mxu0 0.0
        %853 = vmatprep.subr.mxu0 0.0
        %854 = vmatpush1.msra.mxu0 0.0
        %855 = vmatprep.subr.mxu0 0.0
        %856 = vmatpush1.msra.mxu0 0.0
        %857 = vmatprep.subr.mxu0 0.0
        %858 = vmatpush1.msra.mxu0 0.0
        %859 = vmatprep.subr.mxu0 0.0
        %860 = vmatpush1.msra.mxu0 0.0
        %861 = vmatprep.subr.mxu0 0.0
        %862 = vmatpush1.msra.mxu0 0.0
        %863 = vmatprep.subr.mxu0 0.0
        %864 = vmatpush1.msra.mxu0 0.0
        %865 = vmatprep.subr.mxu0 0.0
        %866 = vmatpush1.msra.mxu0 0.0
        %867 = vmatprep.subr.mxu0 0.0
        %868 = vmatpush1.msra.mxu0 0.0
        %869 = vmatprep.subr.mxu0 0.0
        %870 = vmatpush1.msra.mxu0 0.0
        %871 = vmatprep.subr.mxu0 0.0
        %872 = vmatpush1.msra.mxu0 0.0
        %873 = vmatprep.subr.mxu0 0.0
        %874 = vmatpush1.msra.mxu0 0.0
        %875 = vmatprep.subr.mxu0 0.0
        %876 = vmatpush1.msra.mxu0 0.0
        %877 = vmatprep.subr.mxu0 0.0
        %878 = vmatpush1.msra.mxu0 0.0
        %879 = vmatprep.subr.mxu0 0.0
        %880 = vmatpush1.msra.mxu0 0.0
        %881 = vmatprep.mubr.f32.mxu0 0.0
        %882 = vmatmul.mubr.f32.gmra.mrb[0].mxu0 %v810
        %v883 = vpop.f32.mrb[0].mxu0
        %v884 = vadd.f32 0.0, %v883
        %v885 = vpop.f32.mrb[0].mxu0
        %v886 = vadd.f32 0.0, %v885
        %887 = vdwg.mxu0
        %888 = vmatprep.subr.mxu0 0.0
        %889 = vmatpush1.msra.mxu0 %v423
        %890 = vmatprep.subr.mxu0 0.0
        %891 = vmatpush1.msra.mxu0 %v426
        %892 = vmatprep.subr.mxu0 0.0
        %893 = vmatpush1.msra.mxu0 %v429
        %894 = vmatprep.subr.mxu0 0.0
        %895 = vmatpush1.msra.mxu0 %v432
        %896 = vmatprep.subr.mxu0 0.0
        %897 = vmatpush1.msra.mxu0 %v435
        %898 = vmatprep.subr.mxu0 0.0
        %899 = vmatpush1.msra.mxu0 %v438
        %900 = vmatprep.subr.mxu0 0.0
        %901 = vmatpush1.msra.mxu0 %v441
        %902 = vmatprep.subr.mxu0 0.0
        %903 = vmatpush1.msra.mxu0 %v444
        %904 = vmatprep.subr.mxu0 0.0
        %905 = vmatpush1.msra.mxu0 %v447
        %906 = vmatprep.subr.mxu0 0.0
        %907 = vmatpush1.msra.mxu0 %v450
        %908 = vmatprep.subr.mxu0 0.0
        %909 = vmatpush1.msra.mxu0 %v453
        %910 = vmatprep.subr.mxu0 0.0
        %911 = vmatpush1.msra.mxu0 %v456
        %912 = vmatprep.subr.mxu0 0.0
        %913 = vmatpush1.msra.mxu0 %v459
        %914 = vmatprep.subr.mxu0 0.0
        %915 = vmatpush1.msra.mxu0 %v462
        %916 = vmatprep.subr.mxu0 0.0
        %917 = vmatpush1.msra.mxu0 %v465
        %918 = vmatprep.subr.mxu0 0.0
        %919 = vmatpush1.msra.mxu0 %v468
        %920 = vmatprep.subr.mxu0 0.0
        %921 = vmatpush1.msra.mxu0 0.0
        %922 = vmatprep.subr.mxu0 0.0
        %923 = vmatpush1.msra.mxu0 0.0
        %924 = vmatprep.subr.mxu0 0.0
        %925 = vmatpush1.msra.mxu0 0.0
        %926 = vmatprep.subr.mxu0 0.0
        %927 = vmatpush1.msra.mxu0 0.0
        %928 = vmatprep.subr.mxu0 0.0
        %929 = vmatpush1.msra.mxu0 0.0
        %930 = vmatprep.subr.mxu0 0.0
        %931 = vmatpush1.msra.mxu0 0.0
        %932 = vmatprep.subr.mxu0 0.0
        %933 = vmatpush1.msra.mxu0 0.0
        %934 = vmatprep.subr.mxu0 0.0
        %935 = vmatpush1.msra.mxu0 0.0
        %936 = vmatprep.subr.mxu0 0.0
        %937 = vmatpush1.msra.mxu0 0.0
        %938 = vmatprep.subr.mxu0 0.0
        %939 = vmatpush1.msra.mxu0 0.0
        %940 = vmatprep.subr.mxu0 0.0
        %941 = vmatpush1.msra.mxu0 0.0
        %942 = vmatprep.subr.mxu0 0.0
        %943 = vmatpush1.msra.mxu0 0.0
        %944 = vmatprep.subr.mxu0 0.0
        %945 = vmatpush1.msra.mxu0 0.0
        %946 = vmatprep.subr.mxu0 0.0
        %947 = vmatpush1.msra.mxu0 0.0
        %948 = vmatprep.subr.mxu0 0.0
        %949 = vmatpush1.msra.mxu0 0.0
        %950 = vmatprep.subr.mxu0 0.0
        %951 = vmatpush1.msra.mxu0 0.0
        %952 = vmatprep.mubr.f32.mxu0 0.0
        %953 = vmatmul.mubr.f32.gmra.mrb[0].mxu0 %v810
        %v954 = vpop.f32.mrb[0].mxu0
        %v955 = vadd.f32 0.0, %v954
        %v956 = vpop.f32.mrb[0].mxu0
        %957 = vdwg.mxu0
        %v958 = vadd.f32 %v814, %v884
        %v959 = vxor.u32 %v958, 2147483648
        %v960 = vmul.f32 %v959, 1.442695
        %v961 = vpow.pop %v960
        %v962 = vadd.f32 %v961, 1.0
        %v963 = vrcp.pop %v962
        %v964 = vmul.f32 1.0, %v963
        %v965 = vadd.f32 %v815, %v886
        %v966 = vxor.u32 %v965, 2147483648
        %v967 = vmul.f32 %v966, 1.442695
        %v968 = vpow.pop %v967
        %v969 = vadd.f32 %v968, 1.0
        %v970 = vrcp.pop %v969
        %v971 = vmul.f32 1.0, %v970
        %v972 = vadd.f32 %v955, %v474
        %v973 = vmul.f32 %v964, %v972
        %v974 = vadd.f32 %v816, %v973
        %v975 = vtanh.pop %v974
        %v976 = vsub.f32 1.0, %v971
        %v977 = vmul.f32 %v976, %v975
        %v978 = vmul.f32 %v971, %v810
        %v979 = vadd.f32 %v977, %v978
        %s980 = scalar_lea.vmem [#allocation3], 16
        %981 = vst [vmem:[%s980] sm:$0xff] %v979
        %s982 = scalar_lea.vmem %s364, 72 [#allocation6]
        %v983 = vld [vmem:[%s982] sm:$0xff]
        %v984 = vld [vmem:[%s982 + $0x8] sm:$0xff]
        %v985 = vld [vmem:[%s982 + $0x10] sm:$0xff]
        %986 = vmatprep.subr.mxu0 %v422
        %987 = vmatpush1.msra.mxu0 %v421
        %988 = vmatprep.subr.mxu0 %v425
        %989 = vmatpush1.msra.mxu0 %v424
        %990 = vmatprep.subr.mxu0 %v428
        %991 = vmatpush1.msra.mxu0 %v427
        %992 = vmatprep.subr.mxu0 %v431
        %993 = vmatpush1.msra.mxu0 %v430
        %994 = vmatprep.subr.mxu0 %v434
        %995 = vmatpush1.msra.mxu0 %v433
        %996 = vmatprep.subr.mxu0 %v437
        %997 = vmatpush1.msra.mxu0 %v436
        %998 = vmatprep.subr.mxu0 %v440
        %999 = vmatpush1.msra.mxu0 %v439
        %1000 = vmatprep.subr.mxu0 %v443
        %1001 = vmatpush1.msra.mxu0 %v442
        %1002 = vmatprep.subr.mxu0 %v446
        %1003 = vmatpush1.msra.mxu0 %v445
        %1004 = vmatprep.subr.mxu0 %v449
        %1005 = vmatpush1.msra.mxu0 %v448
        %1006 = vmatprep.subr.mxu0 %v452
        %1007 = vmatpush1.msra.mxu0 %v451
        %1008 = vmatprep.subr.mxu0 %v455
        %1009 = vmatpush1.msra.mxu0 %v454
        %1010 = vmatprep.subr.mxu0 %v458
        %1011 = vmatpush1.msra.mxu0 %v457
        %1012 = vmatprep.subr.mxu0 %v461
        %1013 = vmatpush1.msra.mxu0 %v460
        %1014 = vmatprep.subr.mxu0 %v464
        %1015 = vmatpush1.msra.mxu0 %v463
        %1016 = vmatprep.subr.mxu0 %v467
        %1017 = vmatpush1.msra.mxu0 %v466
        %1018 = vmatprep.subr.mxu0 0.0
        %1019 = vmatpush1.msra.mxu0 0.0
        %1020 = vmatprep.subr.mxu0 0.0
        %1021 = vmatpush1.msra.mxu0 0.0
        %1022 = vmatprep.subr.mxu0 0.0
        %1023 = vmatpush1.msra.mxu0 0.0
        %1024 = vmatprep.subr.mxu0 0.0
        %1025 = vmatpush1.msra.mxu0 0.0
        %1026 = vmatprep.subr.mxu0 0.0
        %1027 = vmatpush1.msra.mxu0 0.0
        %1028 = vmatprep.subr.mxu0 0.0
        %1029 = vmatpush1.msra.mxu0 0.0
        %1030 = vmatprep.subr.mxu0 0.0
        %1031 = vmatpush1.msra.mxu0 0.0
        %1032 = vmatprep.subr.mxu0 0.0
        %1033 = vmatpush1.msra.mxu0 0.0
        %1034 = vmatprep.subr.mxu0 0.0
        %1035 = vmatpush1.msra.mxu0 0.0
        %1036 = vmatprep.subr.mxu0 0.0
        %1037 = vmatpush1.msra.mxu0 0.0
        %1038 = vmatprep.subr.mxu0 0.0
        %1039 = vmatpush1.msra.mxu0 0.0
        %1040 = vmatprep.subr.mxu0 0.0
        %1041 = vmatpush1.msra.mxu0 0.0
        %1042 = vmatprep.subr.mxu0 0.0
        %1043 = vmatpush1.msra.mxu0 0.0
        %1044 = vmatprep.subr.mxu0 0.0
        %1045 = vmatpush1.msra.mxu0 0.0
        %1046 = vmatprep.subr.mxu0 0.0
        %1047 = vmatpush1.msra.mxu0 0.0
        %1048 = vmatprep.subr.mxu0 0.0
        %1049 = vmatpush1.msra.mxu0 0.0
        %1050 = vmatprep.mubr.f32.mxu0 0.0
        %1051 = vmatmul.mubr.f32.gmra.mrb[0].mxu0 %v979
        %v1052 = vpop.f32.mrb[0].mxu0
        %v1053 = vadd.f32 0.0, %v1052
        %v1054 = vpop.f32.mrb[0].mxu0
        %v1055 = vadd.f32 0.0, %v1054
        %1056 = vdwg.mxu0
        %1057 = vmatprep.subr.mxu0 0.0
        %1058 = vmatpush1.msra.mxu0 %v423
        %1059 = vmatprep.subr.mxu0 0.0
        %1060 = vmatpush1.msra.mxu0 %v426
        %1061 = vmatprep.subr.mxu0 0.0
        %1062 = vmatpush1.msra.mxu0 %v429
        %1063 = vmatprep.subr.mxu0 0.0
        %1064 = vmatpush1.msra.mxu0 %v432
        %1065 = vmatprep.subr.mxu0 0.0
        %1066 = vmatpush1.msra.mxu0 %v435
        %1067 = vmatprep.subr.mxu0 0.0
        %1068 = vmatpush1.msra.mxu0 %v438
        %1069 = vmatprep.subr.mxu0 0.0
        %1070 = vmatpush1.msra.mxu0 %v441
        %1071 = vmatprep.subr.mxu0 0.0
        %1072 = vmatpush1.msra.mxu0 %v444
        %1073 = vmatprep.subr.mxu0 0.0
        %1074 = vmatpush1.msra.mxu0 %v447
        %1075 = vmatprep.subr.mxu0 0.0
        %1076 = vmatpush1.msra.mxu0 %v450
        %1077 = vmatprep.subr.mxu0 0.0
        %1078 = vmatpush1.msra.mxu0 %v453
        %1079 = vmatprep.subr.mxu0 0.0
        %1080 = vmatpush1.msra.mxu0 %v456
        %1081 = vmatprep.subr.mxu0 0.0
        %1082 = vmatpush1.msra.mxu0 %v459
        %1083 = vmatprep.subr.mxu0 0.0
        %1084 = vmatpush1.msra.mxu0 %v462
        %1085 = vmatprep.subr.mxu0 0.0
        %1086 = vmatpush1.msra.mxu0 %v465
        %1087 = vmatprep.subr.mxu0 0.0
        %1088 = vmatpush1.msra.mxu0 %v468
        %1089 = vmatprep.subr.mxu0 0.0
        %1090 = vmatpush1.msra.mxu0 0.0
        %1091 = vmatprep.subr.mxu0 0.0
        %1092 = vmatpush1.msra.mxu0 0.0
        %1093 = vmatprep.subr.mxu0 0.0
        %1094 = vmatpush1.msra.mxu0 0.0
        %1095 = vmatprep.subr.mxu0 0.0
        %1096 = vmatpush1.msra.mxu0 0.0
        %1097 = vmatprep.subr.mxu0 0.0
        %1098 = vmatpush1.msra.mxu0 0.0
        %1099 = vmatprep.subr.mxu0 0.0
        %1100 = vmatpush1.msra.mxu0 0.0
        %1101 = vmatprep.subr.mxu0 0.0
        %1102 = vmatpush1.msra.mxu0 0.0
        %1103 = vmatprep.subr.mxu0 0.0
        %1104 = vmatpush1.msra.mxu0 0.0
        %1105 = vmatprep.subr.mxu0 0.0
        %1106 = vmatpush1.msra.mxu0 0.0
        %1107 = vmatprep.subr.mxu0 0.0
        %1108 = vmatpush1.msra.mxu0 0.0
        %1109 = vmatprep.subr.mxu0 0.0
        %1110 = vmatpush1.msra.mxu0 0.0
        %1111 = vmatprep.subr.mxu0 0.0
        %1112 = vmatpush1.msra.mxu0 0.0
        %1113 = vmatprep.subr.mxu0 0.0
        %1114 = vmatpush1.msra.mxu0 0.0
        %1115 = vmatprep.subr.mxu0 0.0
        %1116 = vmatpush1.msra.mxu0 0.0
        %1117 = vmatprep.subr.mxu0 0.0
        %1118 = vmatpush1.msra.mxu0 0.0
        %1119 = vmatprep.subr.mxu0 0.0
        %1120 = vmatpush1.msra.mxu0 0.0
        %1121 = vmatprep.mubr.f32.mxu0 0.0
        %1122 = vmatmul.mubr.f32.gmra.mrb[0].mxu0 %v979
        %v1123 = vpop.f32.mrb[0].mxu0
        %v1124 = vadd.f32 0.0, %v1123
        %v1125 = vpop.f32.mrb[0].mxu0
        %1126 = vdwg.mxu0
        %v1127 = vadd.f32 %v983, %v1053
        %v1128 = vxor.u32 %v1127, 2147483648
        %v1129 = vmul.f32 %v1128, 1.442695
        %v1130 = vpow.pop %v1129
        %v1131 = vadd.f32 %v1130, 1.0
        %v1132 = vrcp.pop %v1131
        %v1133 = vmul.f32 1.0, %v1132
        %v1134 = vadd.f32 %v984, %v1055
        %v1135 = vxor.u32 %v1134, 2147483648
        %v1136 = vmul.f32 %v1135, 1.442695
        %v1137 = vpow.pop %v1136
        %v1138 = vadd.f32 %v1137, 1.0
        %v1139 = vrcp.pop %v1138
        %v1140 = vmul.f32 1.0, %v1139
        %v1141 = vadd.f32 %v1124, %v474
        %v1142 = vmul.f32 %v1133, %v1141
        %v1143 = vadd.f32 %v985, %v1142
        %v1144 = vtanh.pop %v1143
        %v1145 = vsub.f32 1.0, %v1140
        %v1146 = vmul.f32 %v1145, %v1144
        %v1147 = vmul.f32 %v1140, %v979
        %v1148 = vadd.f32 %v1146, %v1147
        %s1149 = scalar_lea.vmem [#allocation3], 24
        %1150 = vst [vmem:[%s1149] sm:$0xff] %v1148
        %1151 = vst [vmem:[#allocation2] sm:$0xff] %v1148
        %v1152 = vld [vmem:[#allocation3] sm:$0xff]
        %v1153 = vld [vmem:[#allocation3 + $0x8] sm:$0xff]
        %v1154 = vld [vmem:[#allocation3 + $0x10] sm:$0xff]
        %v1155 = vld [vmem:[#allocation3 + $0x18] sm:$0xff]
        %v1156 = vld [vmem:[#allocation10] sm:$0xff]
        %v1157 = vld [vmem:[#allocation10 + $0x8] sm:$0xff]
        %v1158 = vld [vmem:[#allocation10 + $0x10] sm:$0xff]
        %v1159 = vld [vmem:[#allocation10 + $0x18] sm:$0xff]
        %v1160 = vld [vmem:[#allocation10 + $0x20] sm:$0xff]
        %v1161 = vld [vmem:[#allocation10 + $0x28] sm:$0xff]
        %v1162 = vld [vmem:[#allocation10 + $0x30] sm:$0xff]
        %v1163 = vld [vmem:[#allocation10 + $0x38] sm:$0xff]
        %v1164 = vld [vmem:[#allocation10 + $0x40] sm:$0xff]
        %v1165 = vld [vmem:[#allocation10 + $0x48] sm:$0xff]
        %v1166 = vld [vmem:[#allocation10 + $0x50] sm:$0xff]
        %v1167 = vld [vmem:[#allocation10 + $0x58] sm:$0xff]
        %v1168 = vld [vmem:[#allocation10 + $0x60] sm:$0xff]
        %v1169 = vld [vmem:[#allocation10 + $0x68] sm:$0xff]
        %v1170 = vld [vmem:[#allocation10 + $0x70] sm:$0xff]
        %v1171 = vld [vmem:[#allocation10 + $0x78] sm:$0xff]
        %v1172 = vld [vmem:[#allocation10 + $0x80] sm:$0xff]
        %v1173 = vld [vmem:[#allocation10 + $0x88] sm:$0xff]
        %v1174 = vld [vmem:[#allocation10 + $0x90] sm:$0xff]
        %v1175 = vld [vmem:[#allocation10 + $0x98] sm:$0xff]
        %v1176 = vld [vmem:[#allocation10 + $0xa0] sm:$0xff]
        %v1177 = vld [vmem:[#allocation10 + $0xa8] sm:$0xff]
        %v1178 = vld [vmem:[#allocation10 + $0xb0] sm:$0xff]
        %v1179 = vld [vmem:[#allocation10 + $0xb8] sm:$0xff]
        %v1180 = vld [vmem:[#allocation10 + $0xc0] sm:$0xff]
        %v1181 = vld [vmem:[#allocation10 + $0xc8] sm:$0xff]
        %v1182 = vld [vmem:[#allocation10 + $0xd0] sm:$0xff]
        %v1183 = vld [vmem:[#allocation10 + $0xd8] sm:$0xff]
        %v1184 = vld [vmem:[#allocation10 + $0xe0] sm:$0xff]
        %v1185 = vld [vmem:[#allocation10 + $0xe8] sm:$0xff]
        %v1186 = vld [vmem:[#allocation10 + $0xf0] sm:$0xff]
        %v1187 = vld [vmem:[#allocation10 + $0xf8] sm:$0xff]
        %v1188 = vld [vmem:[#allocation10 + $0x100] sm:$0xff]
        %v1189 = vld [vmem:[#allocation10 + $0x108] sm:$0xff]
        %v1190 = vld [vmem:[#allocation10 + $0x110] sm:$0xff]
        %v1191 = vld [vmem:[#allocation10 + $0x118] sm:$0xff]
        %v1192 = vld [vmem:[#allocation10 + $0x120] sm:$0xff]
        %v1193 = vld [vmem:[#allocation10 + $0x128] sm:$0xff]
        %v1194 = vld [vmem:[#allocation10 + $0x130] sm:$0xff]
        %v1195 = vld [vmem:[#allocation10 + $0x138] sm:$0xff]
        %v1196 = vld [vmem:[#allocation10 + $0x140] sm:$0xff]
        %v1197 = vld [vmem:[#allocation10 + $0x148] sm:$0xff]
        %v1198 = vld [vmem:[#allocation10 + $0x150] sm:$0xff]
        %v1199 = vld [vmem:[#allocation10 + $0x158] sm:$0xff]
        %v1200 = vld [vmem:[#allocation10 + $0x160] sm:$0xff]
        %v1201 = vld [vmem:[#allocation10 + $0x168] sm:$0xff]
        %v1202 = vld [vmem:[#allocation10 + $0x170] sm:$0xff]
        %v1203 = vld [vmem:[#allocation10 + $0x178] sm:$0xff]
        %v1204 = vld [vmem:[%s4] sm:$0x7]
        %v1206 = vlaneseq
        %v1207 = vshrl.u32 %v1206, 7
        %v1208 = vsub.s32 0, %v1207
        %v1209 = vrot.slane %v1204, %v1208
        %v1210 = vlaneseq
        %v1211 = vshrl.u32 %v1210, 7
        %v1212 = vsub.s32 1, %v1211
        %v1213 = vrot.slane %v1204, %v1212
        %v1214 = vlaneseq
        %v1215 = vshrl.u32 %v1214, 7
        %v1216 = vsub.s32 2, %v1215
        %v1217 = vrot.slane %v1204, %v1216
        %1221 = vmatprep.subr.mxu0 %v1157
        %1222 = vmatpush1.msra.mxu0 %v1156
        %1223 = vmatprep.subr.mxu0 %v1160
        %1224 = vmatpush1.msra.mxu0 %v1159
        %1225 = vmatprep.subr.mxu0 %v1163
        %1226 = vmatpush1.msra.mxu0 %v1162
        %1227 = vmatprep.subr.mxu0 %v1166
        %1228 = vmatpush1.msra.mxu0 %v1165
        %1229 = vmatprep.subr.mxu0 %v1169
        %1230 = vmatpush1.msra.mxu0 %v1168
        %1231 = vmatprep.subr.mxu0 %v1172
        %1232 = vmatpush1.msra.mxu0 %v1171
        %1233 = vmatprep.subr.mxu0 %v1175
        %1234 = vmatpush1.msra.mxu0 %v1174
        %1235 = vmatprep.subr.mxu0 %v1178
        %1236 = vmatpush1.msra.mxu0 %v1177
        %1237 = vmatprep.subr.mxu0 %v1181
        %1238 = vmatpush1.msra.mxu0 %v1180
        %1239 = vmatprep.subr.mxu0 %v1184
        %1240 = vmatpush1.msra.mxu0 %v1183
        %1241 = vmatprep.subr.mxu0 %v1187
        %1242 = vmatpush1.msra.mxu0 %v1186
        %1243 = vmatprep.subr.mxu0 %v1190
        %1244 = vmatpush1.msra.mxu0 %v1189
        %1245 = vmatprep.subr.mxu0 %v1193
        %1246 = vmatpush1.msra.mxu0 %v1192
        %1247 = vmatprep.subr.mxu0 %v1196
        %1248 = vmatpush1.msra.mxu0 %v1195
        %1249 = vmatprep.subr.mxu0 %v1199
        %1250 = vmatpush1.msra.mxu0 %v1198
        %1251 = vmatprep.subr.mxu0 %v1202
        %1252 = vmatpush1.msra.mxu0 %v1201
        %1253 = vmatprep.subr.mxu0 0.0
        %1254 = vmatpush1.msra.mxu0 0.0
        %1255 = vmatprep.subr.mxu0 0.0
        %1256 = vmatpush1.msra.mxu0 0.0
        %1257 = vmatprep.subr.mxu0 0.0
        %1258 = vmatpush1.msra.mxu0 0.0
        %1259 = vmatprep.subr.mxu0 0.0
        %1260 = vmatpush1.msra.mxu0 0.0
        %1261 = vmatprep.subr.mxu0 0.0
        %1262 = vmatpush1.msra.mxu0 0.0
        %1263 = vmatprep.subr.mxu0 0.0
        %1264 = vmatpush1.msra.mxu0 0.0
        %1265 = vmatprep.subr.mxu0 0.0
        %1266 = vmatpush1.msra.mxu0 0.0
        %1267 = vmatprep.subr.mxu0 0.0
        %1268 = vmatpush1.msra.mxu0 0.0
        %1269 = vmatprep.subr.mxu0 0.0
        %1270 = vmatpush1.msra.mxu0 0.0
        %1271 = vmatprep.subr.mxu0 0.0
        %1272 = vmatpush1.msra.mxu0 0.0
        %1273 = vmatprep.subr.mxu0 0.0
        %1274 = vmatpush1.msra.mxu0 0.0
        %1275 = vmatprep.subr.mxu0 0.0
        %1276 = vmatpush1.msra.mxu0 0.0
        %1277 = vmatprep.subr.mxu0 0.0
        %1278 = vmatpush1.msra.mxu0 0.0
        %1279 = vmatprep.subr.mxu0 0.0
        %1280 = vmatpush1.msra.mxu0 0.0
        %1281 = vmatprep.subr.mxu0 0.0
        %1282 = vmatpush1.msra.mxu0 0.0
        %1283 = vmatprep.subr.mxu0 0.0
        %1284 = vmatpush1.msra.mxu0 0.0
        %1285 = vmatprep.mubr.f32.mxu0 0.0
        %1286 = vmatmul.mubr.f32.gmra.mrb[0].mxu0 %v1152
        %v1287 = vpop.f32.mrb[0].mxu0
        %v1288 = vadd.f32 %v1209, %v1287
        %v1289 = vpop.f32.mrb[0].mxu0
        %v1290 = vadd.f32 %v1213, %v1289
        %1291 = vmatprep.mubr.f32.mxu0 0.0
        %1292 = vmatmul.mubr.f32.gmra.mrb[0].mxu0 %v1153
        %v1293 = vpop.f32.mrb[0].mxu0
        %v1294 = vadd.f32 %v1209, %v1293
        %v1295 = vpop.f32.mrb[0].mxu0
        %v1296 = vadd.f32 %v1213, %v1295
        %1297 = vmatprep.mubr.f32.mxu0 0.0
        %1298 = vmatmul.mubr.f32.gmra.mrb[0].mxu0 %v1154
        %v1299 = vpop.f32.mrb[0].mxu0
        %v1300 = vadd.f32 %v1209, %v1299
        %v1301 = vpop.f32.mrb[0].mxu0
        %v1302 = vadd.f32 %v1213, %v1301
        %1303 = vmatprep.mubr.f32.mxu0 0.0
        %1304 = vmatmul.mubr.f32.gmra.mrb[0].mxu0 %v1155
        %v1305 = vpop.f32.mrb[0].mxu0
        %v1306 = vadd.f32 %v1209, %v1305
        %v1307 = vpop.f32.mrb[0].mxu0
        %v1308 = vadd.f32 %v1213, %v1307
        %1309 = vdwg.mxu0
        %1310 = vmatprep.subr.mxu0 0.0
        %1311 = vmatpush1.msra.mxu0 %v1158
        %1312 = vmatprep.subr.mxu0 0.0
        %1313 = vmatpush1.msra.mxu0 %v1161
        %1314 = vmatprep.subr.mxu0 0.0
        %1315 = vmatpush1.msra.mxu0 %v1164
        %1316 = vmatprep.subr.mxu0 0.0
        %1317 = vmatpush1.msra.mxu0 %v1167
        %1318 = vmatprep.subr.mxu0 0.0
        %1319 = vmatpush1.msra.mxu0 %v1170
        %1320 = vmatprep.subr.mxu0 0.0
        %1321 = vmatpush1.msra.mxu0 %v1173
        %1322 = vmatprep.subr.mxu0 0.0
        %1323 = vmatpush1.msra.mxu0 %v1176
        %1324 = vmatprep.subr.mxu0 0.0
        %1325 = vmatpush1.msra.mxu0 %v1179
        %1326 = vmatprep.subr.mxu0 0.0
        %1327 = vmatpush1.msra.mxu0 %v1182
        %1328 = vmatprep.subr.mxu0 0.0
        %1329 = vmatpush1.msra.mxu0 %v1185
        %1330 = vmatprep.subr.mxu0 0.0
        %1331 = vmatpush1.msra.mxu0 %v1188
        %1332 = vmatprep.subr.mxu0 0.0
        %1333 = vmatpush1.msra.mxu0 %v1191
        %1334 = vmatprep.subr.mxu0 0.0
        %1335 = vmatpush1.msra.mxu0 %v1194
        %1336 = vmatprep.subr.mxu0 0.0
        %1337 = vmatpush1.msra.mxu0 %v1197
        %1338 = vmatprep.subr.mxu0 0.0
        %1339 = vmatpush1.msra.mxu0 %v1200
        %1340 = vmatprep.subr.mxu0 0.0
        %1341 = vmatpush1.msra.mxu0 %v1203
        %1342 = vmatprep.subr.mxu0 0.0
        %1343 = vmatpush1.msra.mxu0 0.0
        %1344 = vmatprep.subr.mxu0 0.0
        %1345 = vmatpush1.msra.mxu0 0.0
        %1346 = vmatprep.subr.mxu0 0.0
        %1347 = vmatpush1.msra.mxu0 0.0
        %1348 = vmatprep.subr.mxu0 0.0
        %1349 = vmatpush1.msra.mxu0 0.0
        %1350 = vmatprep.subr.mxu0 0.0
        %1351 = vmatpush1.msra.mxu0 0.0
        %1352 = vmatprep.subr.mxu0 0.0
        %1353 = vmatpush1.msra.mxu0 0.0
        %1354 = vmatprep.subr.mxu0 0.0
        %1355 = vmatpush1.msra.mxu0 0.0
        %1356 = vmatprep.subr.mxu0 0.0
        %1357 = vmatpush1.msra.mxu0 0.0
        %1358 = vmatprep.subr.mxu0 0.0
        %1359 = vmatpush1.msra.mxu0 0.0
        %1360 = vmatprep.subr.mxu0 0.0
        %1361 = vmatpush1.msra.mxu0 0.0
        %1362 = vmatprep.subr.mxu0 0.0
        %1363 = vmatpush1.msra.mxu0 0.0
        %1364 = vmatprep.subr.mxu0 0.0
        %1365 = vmatpush1.msra.mxu0 0.0
        %1366 = vmatprep.subr.mxu0 0.0
        %1367 = vmatpush1.msra.mxu0 0.0
        %1368 = vmatprep.subr.mxu0 0.0
        %1369 = vmatpush1.msra.mxu0 0.0
        %1370 = vmatprep.subr.mxu0 0.0
        %1371 = vmatpush1.msra.mxu0 0.0
        %1372 = vmatprep.subr.mxu0 0.0
        %1373 = vmatpush1.msra.mxu0 0.0
        %1374 = vmatprep.mubr.f32.mxu0 0.0
        %1375 = vmatmul.mubr.f32.gmra.mrb[0].mxu0 %v1152
        %v1376 = vpop.f32.mrb[0].mxu0
        %v1377 = vadd.f32 %v1217, %v1376
        %v1378 = vpop.f32.mrb[0].mxu0
        %1379 = vmatprep.mubr.f32.mxu0 0.0
        %1380 = vmatmul.mubr.f32.gmra.mrb[0].mxu0 %v1153
        %v1381 = vpop.f32.mrb[0].mxu0
        %v1382 = vadd.f32 %v1217, %v1381
        %v1383 = vpop.f32.mrb[0].mxu0
        %1384 = vmatprep.mubr.f32.mxu0 0.0
        %1385 = vmatmul.mubr.f32.gmra.mrb[0].mxu0 %v1154
        %v1386 = vpop.f32.mrb[0].mxu0
        %v1387 = vadd.f32 %v1217, %v1386
        %v1388 = vpop.f32.mrb[0].mxu0
        %1389 = vmatprep.mubr.f32.mxu0 0.0
        %1390 = vmatmul.mubr.f32.gmra.mrb[0].mxu0 %v1155
        %v1391 = vpop.f32.mrb[0].mxu0
        %v1392 = vadd.f32 %v1217, %v1391
        %v1393 = vpop.f32.mrb[0].mxu0
        %1394 = vdwg.mxu0
        %1395 = vst [vmem:[#allocation4] sm:$0xff] %v1288
        %1396 = vst [vmem:[#allocation4 + $0x8] sm:$0xff] %v1290
        %1397 = vst [vmem:[#allocation4 + $0x10] sm:$0xff] %v1377
        %1398 = vst [vmem:[#allocation4 + $0x18] sm:$0xff] %v1294
        %1399 = vst [vmem:[#allocation4 + $0x20] sm:$0xff] %v1296
        %1400 = vst [vmem:[#allocation4 + $0x28] sm:$0xff] %v1382
        %1401 = vst [vmem:[#allocation4 + $0x30] sm:$0xff] %v1300
        %1402 = vst [vmem:[#allocation4 + $0x38] sm:$0xff] %v1302
        %1403 = vst [vmem:[#allocation4 + $0x40] sm:$0xff] %v1387
        %1404 = vst [vmem:[#allocation4 + $0x48] sm:$0xff] %v1306
        %1405 = vst [vmem:[#allocation4 + $0x50] sm:$0xff] %v1308
        %1406 = vst [vmem:[#allocation4 + $0x58] sm:$0xff] %v1392
        %v1407 = vld [vmem:[#allocation11] sm:$0xff]
        %v1408 = vld [vmem:[#allocation11 + $0x8] sm:$0xff]
        %v1409 = vld [vmem:[#allocation11 + $0x10] sm:$0xff]
        %v1410 = vld [vmem:[#allocation11 + $0x18] sm:$0xff]
        %v1411 = vld [vmem:[#allocation11 + $0x20] sm:$0xff]
        %v1412 = vld [vmem:[#allocation11 + $0x28] sm:$0xff]
        %v1413 = vld [vmem:[#allocation11 + $0x30] sm:$0xff]
        %v1414 = vld [vmem:[#allocation11 + $0x38] sm:$0xff]
        %v1415 = vld [vmem:[#allocation11 + $0x40] sm:$0xff]
        %v1416 = vld [vmem:[#allocation11 + $0x48] sm:$0xff]
        %v1417 = vld [vmem:[#allocation11 + $0x50] sm:$0xff]
        %v1418 = vld [vmem:[#allocation11 + $0x58] sm:$0xff]
        %v1419 = vld [vmem:[#allocation11 + $0x60] sm:$0xff]
        %v1420 = vld [vmem:[#allocation11 + $0x68] sm:$0xff]
        %v1421 = vld [vmem:[#allocation11 + $0x70] sm:$0xff]
        %v1422 = vld [vmem:[#allocation11 + $0x78] sm:$0xff]
        %v1423 = vld [vmem:[#allocation11 + $0x80] sm:$0xff]
        %v1424 = vld [vmem:[#allocation11 + $0x88] sm:$0xff]
        %v1425 = vld [vmem:[#allocation11 + $0x90] sm:$0xff]
        %v1426 = vld [vmem:[#allocation11 + $0x98] sm:$0xff]
        %v1427 = vld [vmem:[#allocation11 + $0xa0] sm:$0xff]
        %v1428 = vld [vmem:[#allocation11 + $0xa8] sm:$0xff]
        %v1429 = vld [vmem:[#allocation11 + $0xb0] sm:$0xff]
        %v1430 = vld [vmem:[#allocation11 + $0xb8] sm:$0xff]
        %v1431 = vld [vmem:[#allocation11 + $0xc0] sm:$0xff]
        %v1432 = vld [vmem:[#allocation11 + $0xc8] sm:$0xff]
        %v1433 = vld [vmem:[#allocation11 + $0xd0] sm:$0xff]
        %v1434 = vld [vmem:[#allocation11 + $0xd8] sm:$0xff]
        %v1435 = vld [vmem:[#allocation11 + $0xe0] sm:$0xff]
        %v1436 = vld [vmem:[#allocation11 + $0xe8] sm:$0xff]
        %v1437 = vld [vmem:[#allocation11 + $0xf0] sm:$0xff]
        %v1438 = vld [vmem:[#allocation11 + $0xf8] sm:$0xff]
        %v1439 = vld [vmem:[#allocation11 + $0x100] sm:$0xff]
        %v1440 = vld [vmem:[#allocation11 + $0x108] sm:$0xff]
        %v1441 = vld [vmem:[#allocation11 + $0x110] sm:$0xff]
        %v1442 = vld [vmem:[#allocation11 + $0x118] sm:$0xff]
        %v1443 = vld [vmem:[#allocation11 + $0x120] sm:$0xff]
        %v1444 = vld [vmem:[#allocation11 + $0x128] sm:$0xff]
        %v1445 = vld [vmem:[#allocation11 + $0x130] sm:$0xff]
        %v1446 = vld [vmem:[#allocation11 + $0x138] sm:$0xff]
        %v1447 = vld [vmem:[#allocation11 + $0x140] sm:$0xff]
        %v1448 = vld [vmem:[#allocation11 + $0x148] sm:$0xff]
        %v1449 = vld [vmem:[#allocation11 + $0x150] sm:$0xff]
        %v1450 = vld [vmem:[#allocation11 + $0x158] sm:$0xff]
        %v1451 = vld [vmem:[#allocation11 + $0x160] sm:$0xff]
        %v1452 = vld [vmem:[#allocation11 + $0x168] sm:$0xff]
        %v1453 = vld [vmem:[#allocation11 + $0x170] sm:$0xff]
        %v1454 = vld [vmem:[#allocation11 + $0x178] sm:$0xff]
        %v1455 = vld [vmem:[%s6] sm:$0x1]
        %v1457 = vlaneseq
        %v1458 = vshrl.u32 %v1457, 7
        %v1459 = vsub.s32 0, %v1458
        %v1460 = vrot.slane %v1455, %v1459
        %s1462 = scalar_lea.vmem [#allocation2], 8
        %v1463 = vld [vmem:[%s1462] sm:$0xff]
        %v1464 = vld [vmem:[#allocation4] sm:$0xff]
        %v1465 = vld [vmem:[#allocation4 + $0x8] sm:$0xff]
        %v1466 = vld [vmem:[#allocation4 + $0x10] sm:$0xff]
        %1467 = vmatprep.subr.mxu0 %v1408
        %1468 = vmatpush1.msra.mxu0 %v1407
        %1469 = vmatprep.subr.mxu0 %v1411
        %1470 = vmatpush1.msra.mxu0 %v1410
        %1471 = vmatprep.subr.mxu0 %v1414
        %1472 = vmatpush1.msra.mxu0 %v1413
        %1473 = vmatprep.subr.mxu0 %v1417
        %1474 = vmatpush1.msra.mxu0 %v1416
        %1475 = vmatprep.subr.mxu0 %v1420
        %1476 = vmatpush1.msra.mxu0 %v1419
        %1477 = vmatprep.subr.mxu0 %v1423
        %1478 = vmatpush1.msra.mxu0 %v1422
        %1479 = vmatprep.subr.mxu0 %v1426
        %1480 = vmatpush1.msra.mxu0 %v1425
        %1481 = vmatprep.subr.mxu0 %v1429
        %1482 = vmatpush1.msra.mxu0 %v1428
        %1483 = vmatprep.subr.mxu0 %v1432
        %1484 = vmatpush1.msra.mxu0 %v1431
        %1485 = vmatprep.subr.mxu0 %v1435
        %1486 = vmatpush1.msra.mxu0 %v1434
        %1487 = vmatprep.subr.mxu0 %v1438
        %1488 = vmatpush1.msra.mxu0 %v1437
        %1489 = vmatprep.subr.mxu0 %v1441
        %1490 = vmatpush1.msra.mxu0 %v1440
        %1491 = vmatprep.subr.mxu0 %v1444
        %1492 = vmatpush1.msra.mxu0 %v1443
        %1493 = vmatprep.subr.mxu0 %v1447
        %1494 = vmatpush1.msra.mxu0 %v1446
        %1495 = vmatprep.subr.mxu0 %v1450
        %1496 = vmatpush1.msra.mxu0 %v1449
        %1497 = vmatprep.subr.mxu0 %v1453
        %1498 = vmatpush1.msra.mxu0 %v1452
        %1499 = vmatprep.subr.mxu0 0.0
        %1500 = vmatpush1.msra.mxu0 0.0
        %1501 = vmatprep.subr.mxu0 0.0
        %1502 = vmatpush1.msra.mxu0 0.0
        %1503 = vmatprep.subr.mxu0 0.0
        %1504 = vmatpush1.msra.mxu0 0.0
        %1505 = vmatprep.subr.mxu0 0.0
        %1506 = vmatpush1.msra.mxu0 0.0
        %1507 = vmatprep.subr.mxu0 0.0
        %1508 = vmatpush1.msra.mxu0 0.0
        %1509 = vmatprep.subr.mxu0 0.0
        %1510 = vmatpush1.msra.mxu0 0.0
        %1511 = vmatprep.subr.mxu0 0.0
        %1512 = vmatpush1.msra.mxu0 0.0
        %1513 = vmatprep.subr.mxu0 0.0
        %1514 = vmatpush1.msra.mxu0 0.0
        %1515 = vmatprep.subr.mxu0 0.0
        %1516 = vmatpush1.msra.mxu0 0.0
        %1517 = vmatprep.subr.mxu0 0.0
        %1518 = vmatpush1.msra.mxu0 0.0
        %1519 = vmatprep.subr.mxu0 0.0
        %1520 = vmatpush1.msra.mxu0 0.0
        %1521 = vmatprep.subr.mxu0 0.0
        %1522 = vmatpush1.msra.mxu0 0.0
        %1523 = vmatprep.subr.mxu0 0.0
        %1524 = vmatpush1.msra.mxu0 0.0
        %1525 = vmatprep.subr.mxu0 0.0
        %1526 = vmatpush1.msra.mxu0 0.0
        %1527 = vmatprep.subr.mxu0 0.0
        %1528 = vmatpush1.msra.mxu0 0.0
        %1529 = vmatprep.subr.mxu0 0.0
        %1530 = vmatpush1.msra.mxu0 0.0
        %1531 = vmatprep.mubr.f32.mxu0 0.0
        %1532 = vmatmul.mubr.f32.gmra.mrb[0].mxu0 %v1463
        %v1533 = vpop.f32.mrb[0].mxu0
        %v1534 = vadd.f32 0.0, %v1533
        %v1535 = vpop.f32.mrb[0].mxu0
        %v1536 = vadd.f32 0.0, %v1535
        %1537 = vdwg.mxu0
        %1538 = vmatprep.subr.mxu0 0.0
        %1539 = vmatpush1.msra.mxu0 %v1409
        %1540 = vmatprep.subr.mxu0 0.0
        %1541 = vmatpush1.msra.mxu0 %v1412
        %1542 = vmatprep.subr.mxu0 0.0
        %1543 = vmatpush1.msra.mxu0 %v1415
        %1544 = vmatprep.subr.mxu0 0.0
        %1545 = vmatpush1.msra.mxu0 %v1418
        %1546 = vmatprep.subr.mxu0 0.0
        %1547 = vmatpush1.msra.mxu0 %v1421
        %1548 = vmatprep.subr.mxu0 0.0
        %1549 = vmatpush1.msra.mxu0 %v1424
        %1550 = vmatprep.subr.mxu0 0.0
        %1551 = vmatpush1.msra.mxu0 %v1427
        %1552 = vmatprep.subr.mxu0 0.0
        %1553 = vmatpush1.msra.mxu0 %v1430
        %1554 = vmatprep.subr.mxu0 0.0
        %1555 = vmatpush1.msra.mxu0 %v1433
        %1556 = vmatprep.subr.mxu0 0.0
        %1557 = vmatpush1.msra.mxu0 %v1436
        %1558 = vmatprep.subr.mxu0 0.0
        %1559 = vmatpush1.msra.mxu0 %v1439
        %1560 = vmatprep.subr.mxu0 0.0
        %1561 = vmatpush1.msra.mxu0 %v1442
        %1562 = vmatprep.subr.mxu0 0.0
        %1563 = vmatpush1.msra.mxu0 %v1445
        %1564 = vmatprep.subr.mxu0 0.0
        %1565 = vmatpush1.msra.mxu0 %v1448
        %1566 = vmatprep.subr.mxu0 0.0
        %1567 = vmatpush1.msra.mxu0 %v1451
        %1568 = vmatprep.subr.mxu0 0.0
        %1569 = vmatpush1.msra.mxu0 %v1454
        %1570 = vmatprep.subr.mxu0 0.0
        %1571 = vmatpush1.msra.mxu0 0.0
        %1572 = vmatprep.subr.mxu0 0.0
        %1573 = vmatpush1.msra.mxu0 0.0
        %1574 = vmatprep.subr.mxu0 0.0
        %1575 = vmatpush1.msra.mxu0 0.0
        %1576 = vmatprep.subr.mxu0 0.0
        %1577 = vmatpush1.msra.mxu0 0.0
        %1578 = vmatprep.subr.mxu0 0.0
        %1579 = vmatpush1.msra.mxu0 0.0
        %1580 = vmatprep.subr.mxu0 0.0
        %1581 = vmatpush1.msra.mxu0 0.0
        %1582 = vmatprep.subr.mxu0 0.0
        %1583 = vmatpush1.msra.mxu0 0.0
        %1584 = vmatprep.subr.mxu0 0.0
        %1585 = vmatpush1.msra.mxu0 0.0
        %1586 = vmatprep.subr.mxu0 0.0
        %1587 = vmatpush1.msra.mxu0 0.0
        %1588 = vmatprep.subr.mxu0 0.0
        %1589 = vmatpush1.msra.mxu0 0.0
        %1590 = vmatprep.subr.mxu0 0.0
        %1591 = vmatpush1.msra.mxu0 0.0
        %1592 = vmatprep.subr.mxu0 0.0
        %1593 = vmatpush1.msra.mxu0 0.0
        %1594 = vmatprep.subr.mxu0 0.0
        %1595 = vmatpush1.msra.mxu0 0.0
        %1596 = vmatprep.subr.mxu0 0.0
        %1597 = vmatpush1.msra.mxu0 0.0
        %1598 = vmatprep.subr.mxu0 0.0
        %1599 = vmatpush1.msra.mxu0 0.0
        %1600 = vmatprep.subr.mxu0 0.0
        %1601 = vmatpush1.msra.mxu0 0.0
        %1602 = vmatprep.mubr.f32.mxu0 0.0
        %1603 = vmatmul.mubr.f32.gmra.mrb[0].mxu0 %v1463
        %v1604 = vpop.f32.mrb[0].mxu0
        %v1605 = vadd.f32 0.0, %v1604
        %v1606 = vpop.f32.mrb[0].mxu0
        %1607 = vdwg.mxu0
        %v1608 = vadd.f32 %v1464, %v1534
        %v1609 = vxor.u32 %v1608, 2147483648
        %v1610 = vmul.f32 %v1609, 1.442695
        %v1611 = vpow.pop %v1610
        %v1612 = vadd.f32 %v1611, 1.0
        %v1613 = vrcp.pop %v1612
        %v1614 = vmul.f32 1.0, %v1613
        %v1615 = vadd.f32 %v1465, %v1536
        %v1616 = vxor.u32 %v1615, 2147483648
        %v1617 = vmul.f32 %v1616, 1.442695
        %v1618 = vpow.pop %v1617
        %v1619 = vadd.f32 %v1618, 1.0
        %v1620 = vrcp.pop %v1619
        %v1621 = vmul.f32 1.0, %v1620
        %v1622 = vadd.f32 %v1605, %v1460
        %v1623 = vmul.f32 %v1614, %v1622
        %v1624 = vadd.f32 %v1466, %v1623
        %v1625 = vtanh.pop %v1624
        %v1626 = vsub.f32 1.0, %v1621
        %v1627 = vmul.f32 %v1626, %v1625
        %v1628 = vmul.f32 %v1621, %v1463
        %v1629 = vadd.f32 %v1627, %v1628
        %s1630 = scalar_lea.vmem [#allocation4], 24
        %v1631 = vld [vmem:[%s1630] sm:$0xff]
        %v1632 = vld [vmem:[%s1630 + $0x8] sm:$0xff]
        %v1633 = vld [vmem:[%s1630 + $0x10] sm:$0xff]
        %1634 = vmatprep.subr.mxu0 %v1408
        %1635 = vmatpush1.msra.mxu0 %v1407
        %1636 = vmatprep.subr.mxu0 %v1411
        %1637 = vmatpush1.msra.mxu0 %v1410
        %1638 = vmatprep.subr.mxu0 %v1414
        %1639 = vmatpush1.msra.mxu0 %v1413
        %1640 = vmatprep.subr.mxu0 %v1417
        %1641 = vmatpush1.msra.mxu0 %v1416
        %1642 = vmatprep.subr.mxu0 %v1420
        %1643 = vmatpush1.msra.mxu0 %v1419
        %1644 = vmatprep.subr.mxu0 %v1423
        %1645 = vmatpush1.msra.mxu0 %v1422
        %1646 = vmatprep.subr.mxu0 %v1426
        %1647 = vmatpush1.msra.mxu0 %v1425
        %1648 = vmatprep.subr.mxu0 %v1429
        %1649 = vmatpush1.msra.mxu0 %v1428
        %1650 = vmatprep.subr.mxu0 %v1432
        %1651 = vmatpush1.msra.mxu0 %v1431
        %1652 = vmatprep.subr.mxu0 %v1435
        %1653 = vmatpush1.msra.mxu0 %v1434
        %1654 = vmatprep.subr.mxu0 %v1438
        %1655 = vmatpush1.msra.mxu0 %v1437
        %1656 = vmatprep.subr.mxu0 %v1441
        %1657 = vmatpush1.msra.mxu0 %v1440
        %1658 = vmatprep.subr.mxu0 %v1444
        %1659 = vmatpush1.msra.mxu0 %v1443
        %1660 = vmatprep.subr.mxu0 %v1447
        %1661 = vmatpush1.msra.mxu0 %v1446
        %1662 = vmatprep.subr.mxu0 %v1450
        %1663 = vmatpush1.msra.mxu0 %v1449
        %1664 = vmatprep.subr.mxu0 %v1453
        %1665 = vmatpush1.msra.mxu0 %v1452
        %1666 = vmatprep.subr.mxu0 0.0
        %1667 = vmatpush1.msra.mxu0 0.0
        %1668 = vmatprep.subr.mxu0 0.0
        %1669 = vmatpush1.msra.mxu0 0.0
        %1670 = vmatprep.subr.mxu0 0.0
        %1671 = vmatpush1.msra.mxu0 0.0
        %1672 = vmatprep.subr.mxu0 0.0
        %1673 = vmatpush1.msra.mxu0 0.0
        %1674 = vmatprep.subr.mxu0 0.0
        %1675 = vmatpush1.msra.mxu0 0.0
        %1676 = vmatprep.subr.mxu0 0.0
        %1677 = vmatpush1.msra.mxu0 0.0
        %1678 = vmatprep.subr.mxu0 0.0
        %1679 = vmatpush1.msra.mxu0 0.0
        %1680 = vmatprep.subr.mxu0 0.0
        %1681 = vmatpush1.msra.mxu0 0.0
        %1682 = vmatprep.subr.mxu0 0.0
        %1683 = vmatpush1.msra.mxu0 0.0
        %1684 = vmatprep.subr.mxu0 0.0
        %1685 = vmatpush1.msra.mxu0 0.0
        %1686 = vmatprep.subr.mxu0 0.0
        %1687 = vmatpush1.msra.mxu0 0.0
        %1688 = vmatprep.subr.mxu0 0.0
        %1689 = vmatpush1.msra.mxu0 0.0
        %1690 = vmatprep.subr.mxu0 0.0
        %1691 = vmatpush1.msra.mxu0 0.0
        %1692 = vmatprep.subr.mxu0 0.0
        %1693 = vmatpush1.msra.mxu0 0.0
        %1694 = vmatprep.subr.mxu0 0.0
        %1695 = vmatpush1.msra.mxu0 0.0
        %1696 = vmatprep.subr.mxu0 0.0
        %1697 = vmatpush1.msra.mxu0 0.0
        %1698 = vmatprep.mubr.f32.mxu0 0.0
        %1699 = vmatmul.mubr.f32.gmra.mrb[0].mxu0 %v1629
        %v1700 = vpop.f32.mrb[0].mxu0
        %v1701 = vadd.f32 0.0, %v1700
        %v1702 = vpop.f32.mrb[0].mxu0
        %v1703 = vadd.f32 0.0, %v1702
        %1704 = vdwg.mxu0
        %1705 = vmatprep.subr.mxu0 0.0
        %1706 = vmatpush1.msra.mxu0 %v1409
        %1707 = vmatprep.subr.mxu0 0.0
        %1708 = vmatpush1.msra.mxu0 %v1412
        %1709 = vmatprep.subr.mxu0 0.0
        %1710 = vmatpush1.msra.mxu0 %v1415
        %1711 = vmatprep.subr.mxu0 0.0
        %1712 = vmatpush1.msra.mxu0 %v1418
        %1713 = vmatprep.subr.mxu0 0.0
        %1714 = vmatpush1.msra.mxu0 %v1421
        %1715 = vmatprep.subr.mxu0 0.0
        %1716 = vmatpush1.msra.mxu0 %v1424
        %1717 = vmatprep.subr.mxu0 0.0
        %1718 = vmatpush1.msra.mxu0 %v1427
        %1719 = vmatprep.subr.mxu0 0.0
        %1720 = vmatpush1.msra.mxu0 %v1430
        %1721 = vmatprep.subr.mxu0 0.0
        %1722 = vmatpush1.msra.mxu0 %v1433
        %1723 = vmatprep.subr.mxu0 0.0
        %1724 = vmatpush1.msra.mxu0 %v1436
        %1725 = vmatprep.subr.mxu0 0.0
        %1726 = vmatpush1.msra.mxu0 %v1439
        %1727 = vmatprep.subr.mxu0 0.0
        %1728 = vmatpush1.msra.mxu0 %v1442
        %1729 = vmatprep.subr.mxu0 0.0
        %1730 = vmatpush1.msra.mxu0 %v1445
        %1731 = vmatprep.subr.mxu0 0.0
        %1732 = vmatpush1.msra.mxu0 %v1448
        %1733 = vmatprep.subr.mxu0 0.0
        %1734 = vmatpush1.msra.mxu0 %v1451
        %1735 = vmatprep.subr.mxu0 0.0
        %1736 = vmatpush1.msra.mxu0 %v1454
        %1737 = vmatprep.subr.mxu0 0.0
        %1738 = vmatpush1.msra.mxu0 0.0
        %1739 = vmatprep.subr.mxu0 0.0
        %1740 = vmatpush1.msra.mxu0 0.0
        %1741 = vmatprep.subr.mxu0 0.0
        %1742 = vmatpush1.msra.mxu0 0.0
        %1743 = vmatprep.subr.mxu0 0.0
        %1744 = vmatpush1.msra.mxu0 0.0
        %1745 = vmatprep.subr.mxu0 0.0
        %1746 = vmatpush1.msra.mxu0 0.0
        %1747 = vmatprep.subr.mxu0 0.0
        %1748 = vmatpush1.msra.mxu0 0.0
        %1749 = vmatprep.subr.mxu0 0.0
        %1750 = vmatpush1.msra.mxu0 0.0
        %1751 = vmatprep.subr.mxu0 0.0
        %1752 = vmatpush1.msra.mxu0 0.0
        %1753 = vmatprep.subr.mxu0 0.0
        %1754 = vmatpush1.msra.mxu0 0.0
        %1755 = vmatprep.subr.mxu0 0.0
        %1756 = vmatpush1.msra.mxu0 0.0
        %1757 = vmatprep.subr.mxu0 0.0
        %1758 = vmatpush1.msra.mxu0 0.0
        %1759 = vmatprep.subr.mxu0 0.0
        %1760 = vmatpush1.msra.mxu0 0.0
        %1761 = vmatprep.subr.mxu0 0.0
        %1762 = vmatpush1.msra.mxu0 0.0
        %1763 = vmatprep.subr.mxu0 0.0
        %1764 = vmatpush1.msra.mxu0 0.0
        %1765 = vmatprep.subr.mxu0 0.0
        %1766 = vmatpush1.msra.mxu0 0.0
        %1767 = vmatprep.subr.mxu0 0.0
        %1768 = vmatpush1.msra.mxu0 0.0
        %1769 = vmatprep.mubr.f32.mxu0 0.0
        %1770 = vmatmul.mubr.f32.gmra.mrb[0].mxu0 %v1629
        %v1771 = vpop.f32.mrb[0].mxu0
        %v1772 = vadd.f32 0.0, %v1771
        %v1773 = vpop.f32.mrb[0].mxu0
        %1774 = vdwg.mxu0
        %v1775 = vadd.f32 %v1631, %v1701
        %v1776 = vxor.u32 %v1775, 2147483648
        %v1777 = vmul.f32 %v1776, 1.442695
        %v1778 = vpow.pop %v1777
        %v1779 = vadd.f32 %v1778, 1.0
        %v1780 = vrcp.pop %v1779
        %v1781 = vmul.f32 1.0, %v1780
        %v1782 = vadd.f32 %v1632, %v1703
        %v1783 = vxor.u32 %v1782, 2147483648
        %v1784 = vmul.f32 %v1783, 1.442695
        %v1785 = vpow.pop %v1784
        %v1786 = vadd.f32 %v1785, 1.0
        %v1787 = vrcp.pop %v1786
        %v1788 = vmul.f32 1.0, %v1787
        %v1789 = vadd.f32 %v1772, %v1460
        %v1790 = vmul.f32 %v1781, %v1789
        %v1791 = vadd.f32 %v1633, %v1790
        %v1792 = vtanh.pop %v1791
        %v1793 = vsub.f32 1.0, %v1788
        %v1794 = vmul.f32 %v1793, %v1792
        %v1795 = vmul.f32 %v1788, %v1629
        %v1796 = vadd.f32 %v1794, %v1795
        %s1797 = scalar_lea.vmem [#allocation4], 48
        %v1798 = vld [vmem:[%s1797] sm:$0xff]
        %v1799 = vld [vmem:[%s1797 + $0x8] sm:$0xff]
        %v1800 = vld [vmem:[%s1797 + $0x10] sm:$0xff]
        %1801 = vmatprep.subr.mxu0 %v1408
        %1802 = vmatpush1.msra.mxu0 %v1407
        %1803 = vmatprep.subr.mxu0 %v1411
        %1804 = vmatpush1.msra.mxu0 %v1410
        %1805 = vmatprep.subr.mxu0 %v1414
        %1806 = vmatpush1.msra.mxu0 %v1413
        %1807 = vmatprep.subr.mxu0 %v1417
        %1808 = vmatpush1.msra.mxu0 %v1416
        %1809 = vmatprep.subr.mxu0 %v1420
        %1810 = vmatpush1.msra.mxu0 %v1419
        %1811 = vmatprep.subr.mxu0 %v1423
        %1812 = vmatpush1.msra.mxu0 %v1422
        %1813 = vmatprep.subr.mxu0 %v1426
        %1814 = vmatpush1.msra.mxu0 %v1425
        %1815 = vmatprep.subr.mxu0 %v1429
        %1816 = vmatpush1.msra.mxu0 %v1428
        %1817 = vmatprep.subr.mxu0 %v1432
        %1818 = vmatpush1.msra.mxu0 %v1431
        %1819 = vmatprep.subr.mxu0 %v1435
        %1820 = vmatpush1.msra.mxu0 %v1434
        %1821 = vmatprep.subr.mxu0 %v1438
        %1822 = vmatpush1.msra.mxu0 %v1437
        %1823 = vmatprep.subr.mxu0 %v1441
        %1824 = vmatpush1.msra.mxu0 %v1440
        %1825 = vmatprep.subr.mxu0 %v1444
        %1826 = vmatpush1.msra.mxu0 %v1443
        %1827 = vmatprep.subr.mxu0 %v1447
        %1828 = vmatpush1.msra.mxu0 %v1446
        %1829 = vmatprep.subr.mxu0 %v1450
        %1830 = vmatpush1.msra.mxu0 %v1449
        %1831 = vmatprep.subr.mxu0 %v1453
        %1832 = vmatpush1.msra.mxu0 %v1452
        %1833 = vmatprep.subr.mxu0 0.0
        %1834 = vmatpush1.msra.mxu0 0.0
        %1835 = vmatprep.subr.mxu0 0.0
        %1836 = vmatpush1.msra.mxu0 0.0
        %1837 = vmatprep.subr.mxu0 0.0
        %1838 = vmatpush1.msra.mxu0 0.0
        %1839 = vmatprep.subr.mxu0 0.0
        %1840 = vmatpush1.msra.mxu0 0.0
        %1841 = vmatprep.subr.mxu0 0.0
        %1842 = vmatpush1.msra.mxu0 0.0
        %1843 = vmatprep.subr.mxu0 0.0
        %1844 = vmatpush1.msra.mxu0 0.0
        %1845 = vmatprep.subr.mxu0 0.0
        %1846 = vmatpush1.msra.mxu0 0.0
        %1847 = vmatprep.subr.mxu0 0.0
        %1848 = vmatpush1.msra.mxu0 0.0
        %1849 = vmatprep.subr.mxu0 0.0
        %1850 = vmatpush1.msra.mxu0 0.0
        %1851 = vmatprep.subr.mxu0 0.0
        %1852 = vmatpush1.msra.mxu0 0.0
        %1853 = vmatprep.subr.mxu0 0.0
        %1854 = vmatpush1.msra.mxu0 0.0
        %1855 = vmatprep.subr.mxu0 0.0
        %1856 = vmatpush1.msra.mxu0 0.0
        %1857 = vmatprep.subr.mxu0 0.0
        %1858 = vmatpush1.msra.mxu0 0.0
        %1859 = vmatprep.subr.mxu0 0.0
        %1860 = vmatpush1.msra.mxu0 0.0
        %1861 = vmatprep.subr.mxu0 0.0
        %1862 = vmatpush1.msra.mxu0 0.0
        %1863 = vmatprep.subr.mxu0 0.0
        %1864 = vmatpush1.msra.mxu0 0.0
        %1865 = vmatprep.mubr.f32.mxu0 0.0
        %1866 = vmatmul.mubr.f32.gmra.mrb[0].mxu0 %v1796
        %v1867 = vpop.f32.mrb[0].mxu0
        %v1868 = vadd.f32 0.0, %v1867
        %v1869 = vpop.f32.mrb[0].mxu0
        %v1870 = vadd.f32 0.0, %v1869
        %1871 = vdwg.mxu0
        %1872 = vmatprep.subr.mxu0 0.0
        %1873 = vmatpush1.msra.mxu0 %v1409
        %1874 = vmatprep.subr.mxu0 0.0
        %1875 = vmatpush1.msra.mxu0 %v1412
        %1876 = vmatprep.subr.mxu0 0.0
        %1877 = vmatpush1.msra.mxu0 %v1415
        %1878 = vmatprep.subr.mxu0 0.0
        %1879 = vmatpush1.msra.mxu0 %v1418
        %1880 = vmatprep.subr.mxu0 0.0
        %1881 = vmatpush1.msra.mxu0 %v1421
        %1882 = vmatprep.subr.mxu0 0.0
        %1883 = vmatpush1.msra.mxu0 %v1424
        %1884 = vmatprep.subr.mxu0 0.0
        %1885 = vmatpush1.msra.mxu0 %v1427
        %1886 = vmatprep.subr.mxu0 0.0
        %1887 = vmatpush1.msra.mxu0 %v1430
        %1888 = vmatprep.subr.mxu0 0.0
        %1889 = vmatpush1.msra.mxu0 %v1433
        %1890 = vmatprep.subr.mxu0 0.0
        %1891 = vmatpush1.msra.mxu0 %v1436
        %1892 = vmatprep.subr.mxu0 0.0
        %1893 = vmatpush1.msra.mxu0 %v1439
        %1894 = vmatprep.subr.mxu0 0.0
        %1895 = vmatpush1.msra.mxu0 %v1442
        %1896 = vmatprep.subr.mxu0 0.0
        %1897 = vmatpush1.msra.mxu0 %v1445
        %1898 = vmatprep.subr.mxu0 0.0
        %1899 = vmatpush1.msra.mxu0 %v1448
        %1900 = vmatprep.subr.mxu0 0.0
        %1901 = vmatpush1.msra.mxu0 %v1451
        %1902 = vmatprep.subr.mxu0 0.0
        %1903 = vmatpush1.msra.mxu0 %v1454
        %1904 = vmatprep.subr.mxu0 0.0
        %1905 = vmatpush1.msra.mxu0 0.0
        %1906 = vmatprep.subr.mxu0 0.0
        %1907 = vmatpush1.msra.mxu0 0.0
        %1908 = vmatprep.subr.mxu0 0.0
        %1909 = vmatpush1.msra.mxu0 0.0
        %1910 = vmatprep.subr.mxu0 0.0
        %1911 = vmatpush1.msra.mxu0 0.0
        %1912 = vmatprep.subr.mxu0 0.0
        %1913 = vmatpush1.msra.mxu0 0.0
        %1914 = vmatprep.subr.mxu0 0.0
        %1915 = vmatpush1.msra.mxu0 0.0
        %1916 = vmatprep.subr.mxu0 0.0
        %1917 = vmatpush1.msra.mxu0 0.0
        %1918 = vmatprep.subr.mxu0 0.0
        %1919 = vmatpush1.msra.mxu0 0.0
        %1920 = vmatprep.subr.mxu0 0.0
        %1921 = vmatpush1.msra.mxu0 0.0
        %1922 = vmatprep.subr.mxu0 0.0
        %1923 = vmatpush1.msra.mxu0 0.0
        %1924 = vmatprep.subr.mxu0 0.0
        %1925 = vmatpush1.msra.mxu0 0.0
        %1926 = vmatprep.subr.mxu0 0.0
        %1927 = vmatpush1.msra.mxu0 0.0
        %1928 = vmatprep.subr.mxu0 0.0
        %1929 = vmatpush1.msra.mxu0 0.0
        %1930 = vmatprep.subr.mxu0 0.0
        %1931 = vmatpush1.msra.mxu0 0.0
        %1932 = vmatprep.subr.mxu0 0.0
        %1933 = vmatpush1.msra.mxu0 0.0
        %1934 = vmatprep.subr.mxu0 0.0
        %1935 = vmatpush1.msra.mxu0 0.0
        %1936 = vmatprep.mubr.f32.mxu0 0.0
        %1937 = vmatmul.mubr.f32.gmra.mrb[0].mxu0 %v1796
        %v1938 = vpop.f32.mrb[0].mxu0
        %v1939 = vadd.f32 0.0, %v1938
        %v1940 = vpop.f32.mrb[0].mxu0
        %1941 = vdwg.mxu0
        %v1942 = vadd.f32 %v1798, %v1868
        %v1943 = vxor.u32 %v1942, 2147483648
        %v1944 = vmul.f32 %v1943, 1.442695
        %v1945 = vpow.pop %v1944
        %v1946 = vadd.f32 %v1945, 1.0
        %v1947 = vrcp.pop %v1946
        %v1948 = vmul.f32 1.0, %v1947
        %v1949 = vadd.f32 %v1799, %v1870
        %v1950 = vxor.u32 %v1949, 2147483648
        %v1951 = vmul.f32 %v1950, 1.442695
        %v1952 = vpow.pop %v1951
        %v1953 = vadd.f32 %v1952, 1.0
        %v1954 = vrcp.pop %v1953
        %v1955 = vmul.f32 1.0, %v1954
        %v1956 = vadd.f32 %v1939, %v1460
        %v1957 = vmul.f32 %v1948, %v1956
        %v1958 = vadd.f32 %v1800, %v1957
        %v1959 = vtanh.pop %v1958
        %v1960 = vsub.f32 1.0, %v1955
        %v1961 = vmul.f32 %v1960, %v1959
        %v1962 = vmul.f32 %v1955, %v1796
        %v1963 = vadd.f32 %v1961, %v1962
        %s1964 = scalar_lea.vmem [#allocation4], 72
        %v1965 = vld [vmem:[%s1964] sm:$0xff]
        %v1966 = vld [vmem:[%s1964 + $0x8] sm:$0xff]
        %v1967 = vld [vmem:[%s1964 + $0x10] sm:$0xff]
        %1968 = vmatprep.subr.mxu0 %v1408
        %1969 = vmatpush1.msra.mxu0 %v1407
        %1970 = vmatprep.subr.mxu0 %v1411
        %1971 = vmatpush1.msra.mxu0 %v1410
        %1972 = vmatprep.subr.mxu0 %v1414
        %1973 = vmatpush1.msra.mxu0 %v1413
        %1974 = vmatprep.subr.mxu0 %v1417
        %1975 = vmatpush1.msra.mxu0 %v1416
        %1976 = vmatprep.subr.mxu0 %v1420
        %1977 = vmatpush1.msra.mxu0 %v1419
        %1978 = vmatprep.subr.mxu0 %v1423
        %1979 = vmatpush1.msra.mxu0 %v1422
        %1980 = vmatprep.subr.mxu0 %v1426
        %1981 = vmatpush1.msra.mxu0 %v1425
        %1982 = vmatprep.subr.mxu0 %v1429
        %1983 = vmatpush1.msra.mxu0 %v1428
        %1984 = vmatprep.subr.mxu0 %v1432
        %1985 = vmatpush1.msra.mxu0 %v1431
        %1986 = vmatprep.subr.mxu0 %v1435
        %1987 = vmatpush1.msra.mxu0 %v1434
        %1988 = vmatprep.subr.mxu0 %v1438
        %1989 = vmatpush1.msra.mxu0 %v1437
        %1990 = vmatprep.subr.mxu0 %v1441
        %1991 = vmatpush1.msra.mxu0 %v1440
        %1992 = vmatprep.subr.mxu0 %v1444
        %1993 = vmatpush1.msra.mxu0 %v1443
        %1994 = vmatprep.subr.mxu0 %v1447
        %1995 = vmatpush1.msra.mxu0 %v1446
        %1996 = vmatprep.subr.mxu0 %v1450
        %1997 = vmatpush1.msra.mxu0 %v1449
        %1998 = vmatprep.subr.mxu0 %v1453
        %1999 = vmatpush1.msra.mxu0 %v1452
        %2000 = vmatprep.subr.mxu0 0.0
        %2001 = vmatpush1.msra.mxu0 0.0
        %2002 = vmatprep.subr.mxu0 0.0
        %2003 = vmatpush1.msra.mxu0 0.0
        %2004 = vmatprep.subr.mxu0 0.0
        %2005 = vmatpush1.msra.mxu0 0.0
        %2006 = vmatprep.subr.mxu0 0.0
        %2007 = vmatpush1.msra.mxu0 0.0
        %2008 = vmatprep.subr.mxu0 0.0
        %2009 = vmatpush1.msra.mxu0 0.0
        %2010 = vmatprep.subr.mxu0 0.0
        %2011 = vmatpush1.msra.mxu0 0.0
        %2012 = vmatprep.subr.mxu0 0.0
        %2013 = vmatpush1.msra.mxu0 0.0
        %2014 = vmatprep.subr.mxu0 0.0
        %2015 = vmatpush1.msra.mxu0 0.0
        %2016 = vmatprep.subr.mxu0 0.0
        %2017 = vmatpush1.msra.mxu0 0.0
        %2018 = vmatprep.subr.mxu0 0.0
        %2019 = vmatpush1.msra.mxu0 0.0
        %2020 = vmatprep.subr.mxu0 0.0
        %2021 = vmatpush1.msra.mxu0 0.0
        %2022 = vmatprep.subr.mxu0 0.0
        %2023 = vmatpush1.msra.mxu0 0.0
        %2024 = vmatprep.subr.mxu0 0.0
        %2025 = vmatpush1.msra.mxu0 0.0
        %2026 = vmatprep.subr.mxu0 0.0
        %2027 = vmatpush1.msra.mxu0 0.0
        %2028 = vmatprep.subr.mxu0 0.0
        %2029 = vmatpush1.msra.mxu0 0.0
        %2030 = vmatprep.subr.mxu0 0.0
        %2031 = vmatpush1.msra.mxu0 0.0
        %2032 = vmatprep.mubr.f32.mxu0 0.0
        %2033 = vmatmul.mubr.f32.gmra.mrb[0].mxu0 %v1963
        %v2034 = vpop.f32.mrb[0].mxu0
        %v2035 = vadd.f32 0.0, %v2034
        %v2036 = vpop.f32.mrb[0].mxu0
        %v2037 = vadd.f32 0.0, %v2036
        %2038 = vdwg.mxu0
        %2039 = vmatprep.subr.mxu0 0.0
        %2040 = vmatpush1.msra.mxu0 %v1409
        %2041 = vmatprep.subr.mxu0 0.0
        %2042 = vmatpush1.msra.mxu0 %v1412
        %2043 = vmatprep.subr.mxu0 0.0
        %2044 = vmatpush1.msra.mxu0 %v1415
        %2045 = vmatprep.subr.mxu0 0.0
        %2046 = vmatpush1.msra.mxu0 %v1418
        %2047 = vmatprep.subr.mxu0 0.0
        %2048 = vmatpush1.msra.mxu0 %v1421
        %2049 = vmatprep.subr.mxu0 0.0
        %2050 = vmatpush1.msra.mxu0 %v1424
        %2051 = vmatprep.subr.mxu0 0.0
        %2052 = vmatpush1.msra.mxu0 %v1427
        %2053 = vmatprep.subr.mxu0 0.0
        %2054 = vmatpush1.msra.mxu0 %v1430
        %2055 = vmatprep.subr.mxu0 0.0
        %2056 = vmatpush1.msra.mxu0 %v1433
        %2057 = vmatprep.subr.mxu0 0.0
        %2058 = vmatpush1.msra.mxu0 %v1436
        %2059 = vmatprep.subr.mxu0 0.0
        %2060 = vmatpush1.msra.mxu0 %v1439
        %2061 = vmatprep.subr.mxu0 0.0
        %2062 = vmatpush1.msra.mxu0 %v1442
        %2063 = vmatprep.subr.mxu0 0.0
        %2064 = vmatpush1.msra.mxu0 %v1445
        %2065 = vmatprep.subr.mxu0 0.0
        %2066 = vmatpush1.msra.mxu0 %v1448
        %2067 = vmatprep.subr.mxu0 0.0
        %2068 = vmatpush1.msra.mxu0 %v1451
        %2069 = vmatprep.subr.mxu0 0.0
        %2070 = vmatpush1.msra.mxu0 %v1454
        %2071 = vmatprep.subr.mxu0 0.0
        %2072 = vmatpush1.msra.mxu0 0.0
        %2073 = vmatprep.subr.mxu0 0.0
        %2074 = vmatpush1.msra.mxu0 0.0
        %2075 = vmatprep.subr.mxu0 0.0
        %2076 = vmatpush1.msra.mxu0 0.0
        %2077 = vmatprep.subr.mxu0 0.0
        %2078 = vmatpush1.msra.mxu0 0.0
        %2079 = vmatprep.subr.mxu0 0.0
        %2080 = vmatpush1.msra.mxu0 0.0
        %2081 = vmatprep.subr.mxu0 0.0
        %2082 = vmatpush1.msra.mxu0 0.0
        %2083 = vmatprep.subr.mxu0 0.0
        %2084 = vmatpush1.msra.mxu0 0.0
        %2085 = vmatprep.subr.mxu0 0.0
        %2086 = vmatpush1.msra.mxu0 0.0
        %2087 = vmatprep.subr.mxu0 0.0
        %2088 = vmatpush1.msra.mxu0 0.0
        %2089 = vmatprep.subr.mxu0 0.0
        %2090 = vmatpush1.msra.mxu0 0.0
        %2091 = vmatprep.subr.mxu0 0.0
        %2092 = vmatpush1.msra.mxu0 0.0
        %2093 = vmatprep.subr.mxu0 0.0
        %2094 = vmatpush1.msra.mxu0 0.0
        %2095 = vmatprep.subr.mxu0 0.0
        %2096 = vmatpush1.msra.mxu0 0.0
        %2097 = vmatprep.subr.mxu0 0.0
        %2098 = vmatpush1.msra.mxu0 0.0
        %2099 = vmatprep.subr.mxu0 0.0
        %2100 = vmatpush1.msra.mxu0 0.0
        %2101 = vmatprep.subr.mxu0 0.0
        %2102 = vmatpush1.msra.mxu0 0.0
        %2103 = vmatprep.mubr.f32.mxu0 0.0
        %2104 = vmatmul.mubr.f32.gmra.mrb[0].mxu0 %v1963
        %v2105 = vpop.f32.mrb[0].mxu0
        %v2106 = vadd.f32 0.0, %v2105
        %v2107 = vpop.f32.mrb[0].mxu0
        %2108 = vdwg.mxu0
        %v2109 = vadd.f32 %v1965, %v2035
        %v2110 = vxor.u32 %v2109, 2147483648
        %v2111 = vmul.f32 %v2110, 1.442695
        %v2112 = vpow.pop %v2111
        %v2113 = vadd.f32 %v2112, 1.0
        %v2114 = vrcp.pop %v2113
        %v2115 = vmul.f32 1.0, %v2114
        %v2116 = vadd.f32 %v1966, %v2037
        %v2117 = vxor.u32 %v2116, 2147483648
        %v2118 = vmul.f32 %v2117, 1.442695
        %v2119 = vpow.pop %v2118
        %v2120 = vadd.f32 %v2119, 1.0
        %v2121 = vrcp.pop %v2120
        %v2122 = vmul.f32 1.0, %v2121
        %v2123 = vadd.f32 %v2106, %v1460
        %v2124 = vmul.f32 %v2115, %v2123
        %v2125 = vadd.f32 %v1967, %v2124
        %v2126 = vtanh.pop %v2125
        %v2127 = vsub.f32 1.0, %v2122
        %v2128 = vmul.f32 %v2127, %v2126
        %v2129 = vmul.f32 %v2122, %v1963
        %v2130 = vadd.f32 %v2128, %v2129
        %2131 = vst [vmem:[%s1462] sm:$0xff] %v2130
        %v2132 = vld [vmem:[%s7] sm:$0x1]
        %v2134 = vlaneseq
        %v2135 = vshrl.u32 %v2134, 7
        %v2136 = vsub.s32 0, %v2135
        %v2137 = vrot.slane %v2132, %v2136
        %v2139 = vmul.f32 %v2130, %v2137
        %2140 = vadd.xlane.f32.xlu0 %v2139
        %v2141 = vpop.xlane.xlu0 %2140
        %v2142 = vld [vmem:[#allocation5] sm:$0x1]
        %v2144 = vlaneseq
        %v2145 = vshrl.u32 %v2144, 7
        %v2146 = vsub.s32 0, %v2145
        %v2147 = vrot.slane %v2142, %v2146
        %v2149 = vadd.f32 %v2141, %v2147
        %vm2150 = vcmask 7168
        %2151 = vst.msk [vmem:[%s414] sm:$0xff] %vm2150, %v2149
        %p2152 = scmp.lt.s32.totalorder %s31, 0
        %s2153 = scalar_select %p2152, %s31, 0
        %s2154 = smul.addr %s2153, 8
        %s2155 = scalar_lea.vmem %s9, %s2154
        // Predicated region
        $region77: #{tpu_custom_call.1} parent=55 // pred_check
          %p2156 = pneg %p253
        $region78: #{tpu_custom_call.1} parent=55 // pred_check_branch
          %2158 = sbr.rel (%p2156) target = $region80
        $region79: #{tpu_custom_call.1} parent=55 // pred_region
          _
        $region80: #{tpu_custom_call.1} parent=55 // pred_fallthru
          _
        // Predicated region
        $region81: #{tpu_custom_call.1} parent=55 // pred_check
          %p2159 = pneg %p253
        $region82: #{tpu_custom_call.1} parent=55 // pred_check_branch
          %2161 = sbr.rel (%p2159) target = $region84
        $region83: #{tpu_custom_call.1} parent=55 // pred_region
          %p2162 = scmp.lt.s32.totalorder %s31, 0
          %s2163 = scalar_select %p2162, %s31, 0
          %s2164 = smul.addr %s2163, 8
          %s2165 = scalar_lea.vmem %s9, %s2164
        $region84: #{tpu_custom_call.1} parent=55 // pred_fallthru
          _
      $region56: #{tpu_custom_call.1} parent=5 // pred_fallthru
        _
      %p2166 = scmp.le.s32.totalorder 2, %s22
      // Predicated region
      $region85: #{tpu_custom_call.1} parent=5 // pred_check
        %p2167 = pneg %p2166
      $region86: #{tpu_custom_call.1} parent=5 // pred_check_branch
        %2169 = sbr.rel (%p2167) target = $region88
      $region87: #{tpu_custom_call.1} parent=5 // pred_region
        %s2170 = ssub.s32 %s22, 2
      $region88: #{tpu_custom_call.1} parent=5 // pred_fallthru
        _
    $region6: #{tpu_custom_call.1} parent=1 // loop_footer
      %s26 = sadd.s32 1, %s22
    $region7: #{tpu_custom_call.1} parent=1 // loop_footer_branch
      %21 = sbr.rel target = $region3
    $region8: #{tpu_custom_call.1} parent=1 // loop_exit
      _
    %2171 = vsyncpa [#allocation7], 1
    %s2172 = scalar_lea.sflag [#allocation7], 1
    %2173 = vsyncpa %s2172, 1
    %2174 = vsyncpa [#allocation9], 1
    %2175 = vsyncpa [#allocation12], 1

</llo_original>
